<compile_context>
chip_gen: v5e
topology: v5e:2x2
jax: 0.10.0
libtpu: 0.0.40
codegen_flags: <defaults>
</compile_context>

<pallas_src>
import functools

import jax
import jax.numpy as jnp
from jax.experimental import pallas as pl
from jax.experimental.pallas import tpu as pltpu


# -----------------------------------------------------------------------------
# In-kernel helpers
# -----------------------------------------------------------------------------
def _layernorm(x, gamma, beta, eps=1e-5):
    # x: (N, D) f32, gamma/beta: (1, D) f32
    mu = jnp.mean(x, axis=-1, keepdims=True)
    var = jnp.mean((x - mu) ** 2, axis=-1, keepdims=True)
    return (x - mu) * jax.lax.rsqrt(var + eps) * gamma + beta


# -----------------------------------------------------------------------------
# Fused CLIP encoder kernel: grid = (batch_tiles, n_layers)
# -----------------------------------------------------------------------------
def clip_stack_kernel(x_ref,
                      ln1_g_ref, ln1_b_ref,
                      wqkv_ref, bqkv_ref, wo_ref, bo_ref,
                      ln2_g_ref, ln2_b_ref,
                      w1_ref, b1_ref, w2_ref, b2_ref,
                      fg_ref, fb_ref,
                      o_ref, *, n_heads):
    l = pl.program_id(1)
    n_layers = pl.num_programs(1)
    Bt, S, D = x_ref.shape
    H = n_heads
    Dh = D // H
    BS = Bt * S

    # Seed the residual stream from HBM input at the first layer step.  It
    # then stays resident in the revisited output block for the whole layer
    # sweep (accumulator pattern); HBM writeback happens once per batch tile.
    @pl.when(l == 0)
    def _():
        o_ref[...] = x_ref[...]

    x = o_ref[...].reshape(BS, D)                       # (Bt*S, D) f32

    # ---------------- attention block ----------------
    residual = x
    h = _layernorm(x, ln1_g_ref[0], ln1_b_ref[0])
    # QKV projection: bf16 inputs, f32 MXU accumulation, batch-folded M.
    # 1/sqrt(Dh) is already folded into the Q columns of W_qkv / b_qkv.
    qkv = jnp.dot(h.astype(jnp.bfloat16), wqkv_ref[0],
                  preferred_element_type=jnp.float32) + bqkv_ref[0]   # (BS, 3D)

    def to_heads(t):                                    # (BS, D) -> (Bt*H, S, Dh)
        t = t.reshape(Bt, S, H, Dh)
        # Mosaic-safe 3-D transpose (lane dim Dh stays minor) per batch row;
        # Bt is a small static Python int so this is a cheap aligned loop.
        parts = [jnp.transpose(t[b], (1, 0, 2)) for b in range(Bt)]   # (H, S, Dh)
        return parts[0] if Bt == 1 else jnp.concatenate(parts, axis=0)

    qh = to_heads(qkv[:, 0 * D:1 * D])                  # (Bt*H, S, Dh) f32
    kh = to_heads(qkv[:, 1 * D:2 * D])
    vh = to_heads(qkv[:, 2 * D:3 * D])

    # Additive causal bias, one (S, S) pass shared by every head / batch row.
    row = jax.lax.broadcasted_iota(jnp.int32, (S, S), 0)
    col = jax.lax.broadcasted_iota(jnp.int32, (S, S), 1)
    mask_bias = jnp.where(row >= col, 0.0, -1e30).astype(jnp.float32)

    # One batched score/softmax/context pass over the (Bt*H) batch axis.
    s = jnp.einsum('bqd,bkd->bqk',
                   qh.astype(jnp.bfloat16), kh.astype(jnp.bfloat16),
                   preferred_element_type=jnp.float32)  # (Bt*H, S, S) f32
    s = s + mask_bias[None, :, :]
    s = s - jnp.max(s, axis=-1, keepdims=True)
    p = jnp.exp(s)
    p = p * pl.reciprocal(jnp.sum(p, axis=-1, keepdims=True), approx=True)
    ctx = jnp.einsum('bqk,bkd->bqd',
                     p.astype(jnp.bfloat16), vh.astype(jnp.bfloat16),
                     preferred_element_type=jnp.float32)  # (Bt*H, S, Dh) f32

    def from_heads(c):                                  # (Bt*H, S, Dh) -> (BS, D)
        parts = [jnp.transpose(c[b * H:(b + 1) * H], (1, 0, 2)).reshape(S, D)
                 for b in range(Bt)]
        return parts[0] if Bt == 1 else jnp.concatenate(parts, axis=0)

    ctx2 = from_heads(ctx)                              # (BS, D) f32
    # Single output projection with full MXU contraction depth K = D.
    attn = jnp.dot(ctx2.astype(jnp.bfloat16), wo_ref[0],
                   preferred_element_type=jnp.float32) + bo_ref[0]
    x = attn + residual

    # ---------------- MLP block ----------------
    residual = x
    h = _layernorm(x, ln2_g_ref[0], ln2_b_ref[0])
    h = jnp.dot(h.astype(jnp.bfloat16), w1_ref[0],
                preferred_element_type=jnp.float32) + b1_ref[0]
    h = h * jax.nn.sigmoid(1.702 * h)                   # quick-GELU, f32 VPU/EUP
    h = jnp.dot(h.astype(jnp.bfloat16), w2_ref[0],
                preferred_element_type=jnp.float32) + b2_ref[0]
    out = h + residual                                  # (BS, D) f32

    @pl.when(l == n_layers - 1)
    def _():  # fused final LayerNorm on the last layer step
        o_ref[...] = _layernorm(out, fg_ref[...], fb_ref[...]).reshape(Bt, S, D)

    @pl.when(l < n_layers - 1)
    def _():
        o_ref[...] = out.reshape(Bt, S, D)


# -----------------------------------------------------------------------------
# Wrappers
# -----------------------------------------------------------------------------
def _batch_tile(B):
    # Largest divisor of B (capped at 4 for VMEM headroom on v7x) that still
    # leaves >=2 batch grid steps, so the "parallel" axis can feed both v7x
    # TensorCores and activation blocks get pipelined.
    if B <= 1:
        return 1
    for bt in (4, 2, 1):
        if B % bt == 0 and B // bt >= 2:
            return bt
    return 1


def _round_up(x, m):
    return (x + m - 1) // m * m


def clip_stack(x, stacked, final_g, final_b, *, n_heads):
    """Run all transformer layers + final LayerNorm in one pallas_call."""
    B, S, D = x.shape
    L = stacked[0].shape[0]
    Bt = _batch_tile(B)

    def per_layer_spec(p):
        nd = p.ndim
        blk = (1,) + p.shape[1:]
        return pl.BlockSpec(blk, lambda b, l, _nd=nd: (l,) + (0,) * (_nd - 1))

    in_specs = [pl.BlockSpec((Bt, S, D), lambda b, l: (b, 0, 0))]
    in_specs += [per_layer_spec(p) for p in stacked]
    # Final-LN params: constant (tiny) blocks; index never changes so they are
    # fetched once and not re-DMA'd per grid step.
    in_specs += [pl.BlockSpec((1, D), lambda b, l: (0, 0)),
                 pl.BlockSpec((1, D), lambda b, l: (0, 0))]

    kernel = functools.partial(clip_stack_kernel, n_heads=n_heads)
    return pl.pallas_call(
        kernel,
        out_shape=jax.ShapeDtypeStruct((B, S, D), jnp.float32),
        grid=(B // Bt, L),
        in_specs=in_specs,
        out_specs=pl.BlockSpec((Bt, S, D), lambda b, l: (b, 0, 0)),
        compiler_params=pltpu.CompilerParams(
            # batch axis sharded across cores; layer axis carries the
            # resident residual stream (output revisited) -> arbitrary.
            dimension_semantics=("parallel", "arbitrary"),
            # Derived for full-size CLIP: ~2x14 MiB double-buffered per-layer
            # bf16 weights + activation blocks + f32 qkv/MLP/score temporaries
            # (~35-45 MiB) with headroom, and safely under v7x's 64 MiB VMEM.
            vmem_limit_bytes=50 * 1024 * 1024,
        ),
    )(x, *stacked, final_g, final_b)


# -----------------------------------------------------------------------------
# Parameter construction (deterministic, synthetic, layer-stacked)
# -----------------------------------------------------------------------------
def init_params(key, n_vocab, n_embed, n_tokens, n_heads, n_layers):
    D, M = n_embed, 4 * n_embed
    Dh = D // n_heads
    scale = 1.0 / (Dh ** 0.5)           # power of two for Dh in {16, 64} -> exact
    keys = jax.random.split(key, 2 + n_layers)
    tok_emb = jax.random.normal(keys[0], (n_vocab, D), jnp.float32) * 0.02
    pos_emb = jax.random.normal(keys[1], (n_tokens, D), jnp.float32) * 0.02

    # Fold 1/sqrt(Dh) into the Q columns of W_qkv / b_qkv (mathematically
    # identical to scaling q after the projection).
    qkv_col_scale = jnp.concatenate(
        [jnp.full((D,), scale, jnp.float32), jnp.ones((2 * D,), jnp.float32)])

    def w(k, shape, col_scale=None):     # bf16 matmul weights (MXU-native)
        m = jax.random.normal(k, shape, jnp.float32) * 0.02
        if col_scale is not None:
            m = m * col_scale[None, :]
        return m.astype(jnp.bfloat16)

    ln1_g, ln1_b, wqkv, bqkv, wo, bo = [], [], [], [], [], []
    ln2_g, ln2_b, w1, b1, w2, b2 = [], [], [], [], [], []
    for i in range(n_layers):
        lk = jax.random.split(keys[2 + i], 4)
        ln1_g.append(jnp.ones((1, D), jnp.float32))
        ln1_b.append(jnp.zeros((1, D), jnp.float32))
        wqkv.append(w(lk[0], (D, 3 * D), qkv_col_scale))
        bqkv.append(jnp.zeros((1, 3 * D), jnp.float32) * qkv_col_scale[None, :])
        wo.append(w(lk[1], (D, D)))
        bo.append(jnp.zeros((1, D), jnp.float32))
        ln2_g.append(jnp.ones((1, D), jnp.float32))
        ln2_b.append(jnp.zeros((1, D), jnp.float32))
        w1.append(w(lk[2], (D, M)))
        b1.append(jnp.zeros((1, M), jnp.float32))
        w2.append(w(lk[3], (M, D)))
        b2.append(jnp.zeros((1, D), jnp.float32))

    stacked = tuple(jnp.stack(a) for a in
                    (ln1_g, ln1_b, wqkv, bqkv, wo, bo,
                     ln2_g, ln2_b, w1, b1, w2, b2))
    final_g = jnp.ones((1, D), jnp.float32)
    final_b = jnp.zeros((1, D), jnp.float32)
    return tok_emb, pos_emb, stacked, final_g, final_b


# -----------------------------------------------------------------------------
# Full CLIP forward
# -----------------------------------------------------------------------------
def clip_forward(tokens, params, n_heads):
    tok_emb, pos_emb, stacked, final_g, final_b = params
    tokens = tokens.astype(jnp.int32)
    # TODO(synk): token-embedding gather + positional add stay as plain-JAX
    # glue (a tiny HBM gather with no clean blocked Pallas equivalent).
    state = tok_emb[tokens] + pos_emb[None, :, :]       # (B, S, D) f32
    B, S, D = state.shape

    # Pad sequence to a sublane-aligned length; the causal mask hides padded
    # key columns from valid queries and padded rows are sliced off.
    Sp = _round_up(S, 8)
    if Sp != S:
        state = jnp.pad(state, ((0, 0), (0, Sp - S), (0, 0)))

    out = clip_stack(state, stacked, final_g, final_b, n_heads=n_heads)
    return out[:, :S, :]


# -----------------------------------------------------------------------------
# Pure-JAX reference (f32 math on the same bf16-quantized weights)
# -----------------------------------------------------------------------------
def clip_reference(tokens, params, n_heads):
    tok_emb, pos_emb, stacked, final_g, final_b = params
    (ln1_g, ln1_b, wqkv, bqkv, wo, bo,
     ln2_g, ln2_b, w1, b1, w2, b2) = stacked
    x = tok_emb[tokens.astype(jnp.int32)] + pos_emb[None]
    B, S, D = x.shape
    H = n_heads
    Dh = D // H
    L = wqkv.shape[0]
    mask = jnp.tril(jnp.ones((S, S), bool))

    def ln(v, g, b):
        mu = v.mean(-1, keepdims=True)
        var = ((v - mu) ** 2).mean(-1, keepdims=True)
        return (v - mu) * jax.lax.rsqrt(var + 1e-5) * g + b

    for i in range(L):
        r = x
        h = ln(x, ln1_g[i], ln1_b[i])
        qkv = h @ wqkv[i].astype(jnp.float32) + bqkv[i]
        q = qkv[..., :D].reshape(B, S, H, Dh).transpose(0, 2, 1, 3)
        k = qkv[..., D:2 * D].reshape(B, S, H, Dh).transpose(0, 2, 1, 3)
        v = qkv[..., 2 * D:].reshape(B, S, H, Dh).transpose(0, 2, 1, 3)
        s = jnp.einsum('bhqd,bhkd->bhqk', q, k)          # scale folded into W_q
        s = jnp.where(mask[None, None], s, -1e30)
        p = jax.nn.softmax(s, axis=-1)
        c = jnp.einsum('bhqk,bhkd->bhqd', p, v).transpose(0, 2, 1, 3).reshape(B, S, D)
        x = c @ wo[i].astype(jnp.float32) + bo[i] + r
        r = x
        h = ln(x, ln2_g[i], ln2_b[i])
        h = h @ w1[i].astype(jnp.float32) + b1[i]
        h = h * jax.nn.sigmoid(1.702 * h)
        x = h @ w2[i].astype(jnp.float32) + b2[i] + r
    return ln(x, final_g, final_b)


# -----------------------------------------------------------------------------
if __name__ == "__main__":
    # small, self-consistent shapes (original: vocab=49408, D=768, S=77, 12/12)
    N_VOCAB, N_EMBED, N_TOKENS, N_HEADS, N_LAYERS, BATCH = 100, 64, 16, 4, 2, 2

    key = jax.random.PRNGKey(0)
    pkey, tkey = jax.random.split(key)
    params = init_params(pkey, N_VOCAB, N_EMBED, N_TOKENS, N_HEADS, N_LAYERS)
    tokens = jax.random.randint(tkey, (BATCH, N_TOKENS), 0, N_VOCAB, dtype=jnp.int32)

    out = clip_forward(tokens, params, N_HEADS)
    out = jax.block_until_ready(out)
    assert out.shape == (BATCH, N_TOKENS, N_EMBED)
    assert bool(jnp.all(jnp.isfinite(out)))

    # Loose tolerance: bf16 matmul inputs + approx-reciprocal softmax vs f32 ref.
    ref = clip_reference(tokens, params, N_HEADS)
    max_err = float(jnp.max(jnp.abs(out - ref)))
    assert max_err < 1e-1, f"max abs error vs reference too large: {max_err}"

    print("KERNEL_OK")
</pallas_src>

<mosaic_0001>
module attributes {stable_mosaic.version = 11 : i64} {
  func.func @clip_stack_kernel(%arg0: i32, %arg1: i32, %arg2: memref<1x16x64xf32, #tpu.memory_space<vmem>>, %arg3: memref<1x1x64xf32, #tpu.memory_space<vmem>>, %arg4: memref<1x1x64xf32, #tpu.memory_space<vmem>>, %arg5: memref<1x64x192xbf16, #tpu.memory_space<vmem>>, %arg6: memref<1x1x192xf32, #tpu.memory_space<vmem>>, %arg7: memref<1x64x64xbf16, #tpu.memory_space<vmem>>, %arg8: memref<1x1x64xf32, #tpu.memory_space<vmem>>, %arg9: memref<1x1x64xf32, #tpu.memory_space<vmem>>, %arg10: memref<1x1x64xf32, #tpu.memory_space<vmem>>, %arg11: memref<1x64x256xbf16, #tpu.memory_space<vmem>>, %arg12: memref<1x1x256xf32, #tpu.memory_space<vmem>>, %arg13: memref<1x256x64xbf16, #tpu.memory_space<vmem>>, %arg14: memref<1x1x64xf32, #tpu.memory_space<vmem>>, %arg15: memref<1x64xf32, #tpu.memory_space<vmem>>, %arg16: memref<1x64xf32, #tpu.memory_space<vmem>>, %arg17: memref<1x16x64xf32, #tpu.memory_space<vmem>>) attributes {dimension_semantics = [#tpu.dimension_semantics<parallel>, #tpu.dimension_semantics<arbitrary>], iteration_bounds = array<i64: 2, 2>, scalar_prefetch = 0 : i64, scratch_operands = 0 : i64, tpu.core_type = #tpu.core_type<tc>, window_params = [{transform_indices = @transform_0, window_bounds = array<i64: 1, 16, 64>}, {transform_indices = @transform_1, window_bounds = array<i64: 1, 1, 64>}, {transform_indices = @transform_2, window_bounds = array<i64: 1, 1, 64>}, {transform_indices = @transform_3, window_bounds = array<i64: 1, 64, 192>}, {transform_indices = @transform_4, window_bounds = array<i64: 1, 1, 192>}, {transform_indices = @transform_5, window_bounds = array<i64: 1, 64, 64>}, {transform_indices = @transform_6, window_bounds = array<i64: 1, 1, 64>}, {transform_indices = @transform_7, window_bounds = array<i64: 1, 1, 64>}, {transform_indices = @transform_8, window_bounds = array<i64: 1, 1, 64>}, {transform_indices = @transform_9, window_bounds = array<i64: 1, 64, 256>}, {transform_indices = @transform_10, window_bounds = array<i64: 1, 1, 256>}, {transform_indices = @transform_11, window_bounds = array<i64: 1, 256, 64>}, {transform_indices = @transform_12, window_bounds = array<i64: 1, 1, 64>}, {pipeline_mode = #tpu.pipeline_mode<synchronous>, transform_indices = @transform_13, window_bounds = array<i64: 1, 64>}, {pipeline_mode = #tpu.pipeline_mode<synchronous>, transform_indices = @transform_14, window_bounds = array<i64: 1, 64>}, {transform_indices = @transform_15, window_bounds = array<i64: 1, 16, 64>}]} {
    %c0_i32 = arith.constant 0 : i32
    %0 = arith.cmpi eq, %arg1, %c0_i32 : i32
    %1 = arith.extui %0 : i1 to i32
    %c0_i32_0 = arith.constant 0 : i32
    %2 = arith.cmpi ne, %1, %c0_i32_0 : i32
    scf.if %2 {
      %c0_63 = arith.constant 0 : index
      %c0_64 = arith.constant 0 : index
      %c0_65 = arith.constant 0 : index
      %144 = vector.load %arg2[%c0_63, %c0_64, %c0_65] : memref<1x16x64xf32, #tpu.memory_space<vmem>>, vector<1x16x64xf32>
      %c0_66 = arith.constant 0 : index
      %c0_67 = arith.constant 0 : index
      %c0_68 = arith.constant 0 : index
      %145 = vector.load %arg17[%c0_66, %c0_67, %c0_68] : memref<1x16x64xf32, #tpu.memory_space<vmem>>, vector<1x16x64xf32>
      tpu.vector_store %arg17[%c0_66, %c0_67, %c0_68], %144 {strides = array<i32>} : memref<1x16x64xf32, #tpu.memory_space<vmem>>, vector<1x16x64xf32>,
    } else {
    }
    %c0 = arith.constant 0 : index
    %c0_1 = arith.constant 0 : index
    %c0_2 = arith.constant 0 : index
    %3 = vector.load %arg17[%c0, %c0_1, %c0_2] : memref<1x16x64xf32, #tpu.memory_space<vmem>>, vector<1x16x64xf32>
    %4 = vector.shape_cast %3 : vector<1x16x64xf32> to vector<16x64xf32>
    %c0_3 = arith.constant 0 : index
    %c0_4 = arith.constant 0 : index
    %c0_5 = arith.constant 0 : index
    %5 = vector.load %arg3[%c0_3, %c0_4, %c0_5] : memref<1x1x64xf32, #tpu.memory_space<vmem>>, vector<1x1x64xf32>
    %6 = vector.shape_cast %5 : vector<1x1x64xf32> to vector<1x64xf32>
    %c0_6 = arith.constant 0 : index
    %c0_7 = arith.constant 0 : index
    %c0_8 = arith.constant 0 : index
    %7 = vector.load %arg4[%c0_6, %c0_7, %c0_8] : memref<1x1x64xf32, #tpu.memory_space<vmem>>, vector<1x1x64xf32>
    %8 = vector.shape_cast %7 : vector<1x1x64xf32> to vector<1x64xf32>
    %cst = arith.constant dense<0.000000e+00> : vector<16xf32>
    %9 = vector.multi_reduction <add>, %4, %cst [1] : vector<16x64xf32> to vector<16xf32>
    %10 = vector.shape_cast %9 : vector<16xf32> to vector<16x1xf32>
    %cst_9 = arith.constant 6.400000e+01 : f32
    %11 = vector.broadcast %cst_9 : f32 to vector<16x1xf32>
    %12 = arith.divf %10, %11 : vector<16x1xf32>
    %13 = vector.broadcast %12 : vector<16x1xf32> to vector<16x64xf32>
    %14 = arith.subf %4, %13 : vector<16x64xf32>
    %15 = arith.mulf %14, %14 : vector<16x64xf32>
    %cst_10 = arith.constant dense<0.000000e+00> : vector<16xf32>
    %16 = vector.multi_reduction <add>, %15, %cst_10 [1] : vector<16x64xf32> to vector<16xf32>
    %17 = vector.shape_cast %16 : vector<16xf32> to vector<16x1xf32>
    %cst_11 = arith.constant 6.400000e+01 : f32
    %18 = vector.broadcast %cst_11 : f32 to vector<16x1xf32>
    %19 = arith.divf %17, %18 : vector<16x1xf32>
    %20 = vector.broadcast %12 : vector<16x1xf32> to vector<16x64xf32>
    %21 = arith.subf %4, %20 : vector<16x64xf32>
    %cst_12 = arith.constant 9.99999974E-6 : f32
    %22 = vector.broadcast %cst_12 : f32 to vector<16x1xf32>
    %23 = arith.addf %19, %22 : vector<16x1xf32>
    %24 = math.rsqrt %23 : vector<16x1xf32>
    %25 = vector.broadcast %24 : vector<16x1xf32> to vector<16x64xf32>
    %26 = arith.mulf %21, %25 : vector<16x64xf32>
    %27 = vector.broadcast %6 : vector<1x64xf32> to vector<16x64xf32>
    %28 = arith.mulf %26, %27 : vector<16x64xf32>
    %29 = vector.broadcast %8 : vector<1x64xf32> to vector<16x64xf32>
    %30 = arith.addf %28, %29 : vector<16x64xf32>
    %31 = arith.truncf %30 : vector<16x64xf32> to vector<16x64xbf16>
    %c0_13 = arith.constant 0 : index
    %c0_14 = arith.constant 0 : index
    %c0_15 = arith.constant 0 : index
    %32 = vector.load %arg5[%c0_13, %c0_14, %c0_15] : memref<1x64x192xbf16, #tpu.memory_space<vmem>>, vector<1x64x192xbf16>
    %33 = vector.shape_cast %32 : vector<1x64x192xbf16> to vector<64x192xbf16>
    %cst_16 = arith.constant dense<0.000000e+00> : vector<16x192xf32>
    %34 = tpu.matmul %31, %33, %cst_16 {dimension_numbers = #tpu.dot_dimension_numbers<[1], [0], [0], [1], [0, 0, 1, 1], [], []>} : vector<16x64xbf16>, vector<64x192xbf16>, vector<16x192xf32> -> vector<16x192xf32>
    %c0_17 = arith.constant 0 : index
    %c0_18 = arith.constant 0 : index
    %c0_19 = arith.constant 0 : index
    %35 = vector.load %arg6[%c0_17, %c0_18, %c0_19] : memref<1x1x192xf32, #tpu.memory_space<vmem>>, vector<1x1x192xf32>
    %36 = vector.shape_cast %35 : vector<1x1x192xf32> to vector<1x192xf32>
    %37 = vector.broadcast %36 : vector<1x192xf32> to vector<16x192xf32>
    %38 = arith.addf %34, %37 : vector<16x192xf32>
    %39 = vector.extract_strided_slice %38 {offsets = [0, 0], sizes = [16, 64], strides = [1, 1]} : vector<16x192xf32> to vector<16x64xf32>
    %40 = vector.shape_cast %39 : vector<16x64xf32> to vector<1x16x4x16xf32>
    %41 = vector.shape_cast %40 : vector<1x16x4x16xf32> to vector<16x4x16xf32>
    %42 = tpu.transpose %41, [1, 0, 2] : vector<16x4x16xf32> -> vector<4x16x16xf32>
    %43 = vector.extract_strided_slice %38 {offsets = [0, 64], sizes = [16, 64], strides = [1, 1]} : vector<16x192xf32> to vector<16x64xf32>
    %44 = vector.shape_cast %43 : vector<16x64xf32> to vector<1x16x4x16xf32>
    %45 = vector.shape_cast %44 : vector<1x16x4x16xf32> to vector<16x4x16xf32>
    %46 = tpu.transpose %45, [1, 0, 2] : vector<16x4x16xf32> -> vector<4x16x16xf32>
    %47 = vector.extract_strided_slice %38 {offsets = [0, 128], sizes = [16, 64], strides = [1, 1]} : vector<16x192xf32> to vector<16x64xf32>
    %48 = vector.shape_cast %47 : vector<16x64xf32> to vector<1x16x4x16xf32>
    %49 = vector.shape_cast %48 : vector<1x16x4x16xf32> to vector<16x4x16xf32>
    %50 = tpu.transpose %49, [1, 0, 2] : vector<16x4x16xf32> -> vector<4x16x16xf32>
    %51 = tpu.iota {dimensions = array<i32: 0>} : vector<16x16xi32>
    %52 = tpu.iota {dimensions = array<i32: 1>} : vector<16x16xi32>
    %53 = arith.cmpi sge, %51, %52 : vector<16x16xi32>
    %cst_20 = arith.constant 0.000000e+00 : f32
    %cst_21 = arith.constant -1.000000e+30 : f32
    %54 = vector.broadcast %cst_20 : f32 to vector<16x16xf32>
    %55 = vector.broadcast %cst_21 : f32 to vector<16x16xf32>
    %56 = arith.select %53, %54, %55 : vector<16x16xi1>, vector<16x16xf32>
    %57 = arith.truncf %42 : vector<4x16x16xf32> to vector<4x16x16xbf16>
    %58 = arith.truncf %46 : vector<4x16x16xf32> to vector<4x16x16xbf16>
    "tpu.trace_start"() <{level = 10 : i32, message = "bqd,bkd->bqk"}> : () -> ()
    %cst_22 = arith.constant dense<0.000000e+00> : vector<4x16x16xf32>
    %59 = tpu.matmul %57, %58, %cst_22 {dimension_numbers = #tpu.dot_dimension_numbers<[2], [2], [1], [1], [0, 0, 0, 1, 1, 1], [0], [0]>} : vector<4x16x16xbf16>, vector<4x16x16xbf16>, vector<4x16x16xf32> -> vector<4x16x16xf32>
    "tpu.trace_stop"() : () -> ()
    %60 = vector.shape_cast %56 : vector<16x16xf32> to vector<1x16x16xf32>
    %61 = vector.broadcast %60 : vector<1x16x16xf32> to vector<4x16x16xf32>
    %62 = arith.addf %59, %61 : vector<4x16x16xf32>
    %cst_23 = arith.constant dense<0xFF800000> : vector<4x16xf32>
    %63 = vector.multi_reduction <maximumf>, %62, %cst_23 [2] : vector<4x16x16xf32> to vector<4x16xf32>
    %64 = vector.shape_cast %63 : vector<4x16xf32> to vector<4x16x1xf32>
    %65 = vector.broadcast %64 : vector<4x16x1xf32> to vector<4x16x16xf32>
    %66 = arith.subf %62, %65 : vector<4x16x16xf32>
    %67 = math.exp %66 : vector<4x16x16xf32>
    %cst_24 = arith.constant dense<0.000000e+00> : vector<4x16xf32>
    %68 = vector.multi_reduction <add>, %67, %cst_24 [2] : vector<4x16x16xf32> to vector<4x16xf32>
    %69 = vector.shape_cast %68 : vector<4x16xf32> to vector<4x16x1xf32>
    %70 = tpu.reciprocal %69 {approx = true} : vector<4x16x1xf32> -> vector<4x16x1xf32>
    %71 = vector.broadcast %70 : vector<4x16x1xf32> to vector<4x16x16xf32>
    %72 = arith.mulf %67, %71 : vector<4x16x16xf32>
    %73 = arith.truncf %72 : vector<4x16x16xf32> to vector<4x16x16xbf16>
    %74 = arith.truncf %50 : vector<4x16x16xf32> to vector<4x16x16xbf16>
    "tpu.trace_start"() <{level = 10 : i32, message = "bqk,bkd->bqd"}> : () -> ()
    %cst_25 = arith.constant dense<0.000000e+00> : vector<4x16x16xf32>
    %75 = tpu.matmul %73, %74, %cst_25 {dimension_numbers = #tpu.dot_dimension_numbers<[2], [1], [1], [2], [0, 0, 0, 1, 1, 2], [0], [0]>} : vector<4x16x16xbf16>, vector<4x16x16xbf16>, vector<4x16x16xf32> -> vector<4x16x16xf32>
    "tpu.trace_stop"() : () -> ()
    %76 = tpu.transpose %75, [1, 0, 2] : vector<4x16x16xf32> -> vector<16x4x16xf32>
    %77 = vector.shape_cast %76 : vector<16x4x16xf32> to vector<16x64xf32>
    %78 = arith.truncf %77 : vector<16x64xf32> to vector<16x64xbf16>
    %c0_26 = arith.constant 0 : index
    %c0_27 = arith.constant 0 : index
    %c0_28 = arith.constant 0 : index
    %79 = vector.load %arg7[%c0_26, %c0_27, %c0_28] : memref<1x64x64xbf16, #tpu.memory_space<vmem>>, vector<1x64x64xbf16>
    %80 = vector.shape_cast %79 : vector<1x64x64xbf16> to vector<64x64xbf16>
    %cst_29 = arith.constant dense<0.000000e+00> : vector<16x64xf32>
    %81 = tpu.matmul %78, %80, %cst_29 {dimension_numbers = #tpu.dot_dimension_numbers<[1], [0], [0], [1], [0, 0, 1, 1], [], []>} : vector<16x64xbf16>, vector<64x64xbf16>, vector<16x64xf32> -> vector<16x64xf32>
    %c0_30 = arith.constant 0 : index
    %c0_31 = arith.constant 0 : index
    %c0_32 = arith.constant 0 : index
    %82 = vector.load %arg8[%c0_30, %c0_31, %c0_32] : memref<1x1x64xf32, #tpu.memory_space<vmem>>, vector<1x1x64xf32>
    %83 = vector.shape_cast %82 : vector<1x1x64xf32> to vector<1x64xf32>
    %84 = vector.broadcast %83 : vector<1x64xf32> to vector<16x64xf32>
    %85 = arith.addf %81, %84 : vector<16x64xf32>
    %86 = arith.addf %85, %4 : vector<16x64xf32>
    %c0_33 = arith.constant 0 : index
    %c0_34 = arith.constant 0 : index
    %c0_35 = arith.constant 0 : index
    %87 = vector.load %arg9[%c0_33, %c0_34, %c0_35] : memref<1x1x64xf32, #tpu.memory_space<vmem>>, vector<1x1x64xf32>
    %88 = vector.shape_cast %87 : vector<1x1x64xf32> to vector<1x64xf32>
    %c0_36 = arith.constant 0 : index
    %c0_37 = arith.constant 0 : index
    %c0_38 = arith.constant 0 : index
    %89 = vector.load %arg10[%c0_36, %c0_37, %c0_38] : memref<1x1x64xf32, #tpu.memory_space<vmem>>, vector<1x1x64xf32>
    %90 = vector.shape_cast %89 : vector<1x1x64xf32> to vector<1x64xf32>
    %cst_39 = arith.constant dense<0.000000e+00> : vector<16xf32>
    %91 = vector.multi_reduction <add>, %86, %cst_39 [1] : vector<16x64xf32> to vector<16xf32>
    %92 = vector.shape_cast %91 : vector<16xf32> to vector<16x1xf32>
    %cst_40 = arith.constant 6.400000e+01 : f32
    %93 = vector.broadcast %cst_40 : f32 to vector<16x1xf32>
    %94 = arith.divf %92, %93 : vector<16x1xf32>
    %95 = vector.broadcast %94 : vector<16x1xf32> to vector<16x64xf32>
    %96 = arith.subf %86, %95 : vector<16x64xf32>
    %97 = arith.mulf %96, %96 : vector<16x64xf32>
    %cst_41 = arith.constant dense<0.000000e+00> : vector<16xf32>
    %98 = vector.multi_reduction <add>, %97, %cst_41 [1] : vector<16x64xf32> to vector<16xf32>
    %99 = vector.shape_cast %98 : vector<16xf32> to vector<16x1xf32>
    %cst_42 = arith.constant 6.400000e+01 : f32
    %100 = vector.broadcast %cst_42 : f32 to vector<16x1xf32>
    %101 = arith.divf %99, %100 : vector<16x1xf32>
    %102 = vector.broadcast %94 : vector<16x1xf32> to vector<16x64xf32>
    %103 = arith.subf %86, %102 : vector<16x64xf32>
    %cst_43 = arith.constant 9.99999974E-6 : f32
    %104 = vector.broadcast %cst_43 : f32 to vector<16x1xf32>
    %105 = arith.addf %101, %104 : vector<16x1xf32>
    %106 = math.rsqrt %105 : vector<16x1xf32>
    %107 = vector.broadcast %106 : vector<16x1xf32> to vector<16x64xf32>
    %108 = arith.mulf %103, %107 : vector<16x64xf32>
    %109 = vector.broadcast %88 : vector<1x64xf32> to vector<16x64xf32>
    %110 = arith.mulf %108, %109 : vector<16x64xf32>
    %111 = vector.broadcast %90 : vector<1x64xf32> to vector<16x64xf32>
    %112 = arith.addf %110, %111 : vector<16x64xf32>
    %113 = arith.truncf %112 : vector<16x64xf32> to vector<16x64xbf16>
    %c0_44 = arith.constant 0 : index
    %c0_45 = arith.constant 0 : index
    %c0_46 = arith.constant 0 : index
    %114 = vector.load %arg11[%c0_44, %c0_45, %c0_46] : memref<1x64x256xbf16, #tpu.memory_space<vmem>>, vector<1x64x256xbf16>
    %115 = vector.shape_cast %114 : vector<1x64x256xbf16> to vector<64x256xbf16>
    %cst_47 = arith.constant dense<0.000000e+00> : vector<16x256xf32>
    %116 = tpu.matmul %113, %115, %cst_47 {dimension_numbers = #tpu.dot_dimension_numbers<[1], [0], [0], [1], [0, 0, 1, 1], [], []>} : vector<16x64xbf16>, vector<64x256xbf16>, vector<16x256xf32> -> vector<16x256xf32>
    %c0_48 = arith.constant 0 : index
    %c0_49 = arith.constant 0 : index
    %c0_50 = arith.constant 0 : index
    %117 = vector.load %arg12[%c0_48, %c0_49, %c0_50] : memref<1x1x256xf32, #tpu.memory_space<vmem>>, vector<1x1x256xf32>
    %118 = vector.shape_cast %117 : vector<1x1x256xf32> to vector<1x256xf32>
    %119 = vector.broadcast %118 : vector<1x256xf32> to vector<16x256xf32>
    %120 = arith.addf %116, %119 : vector<16x256xf32>
    %cst_51 = arith.constant 1.702000e+00 : f32
    %121 = vector.broadcast %cst_51 : f32 to vector<16x256xf32>
    %122 = arith.mulf %121, %120 : vector<16x256xf32>
    %123 = arith.negf %122 : vector<16x256xf32>
    %124 = math.exp %123 : vector<16x256xf32>
    %cst_52 = arith.constant 1.000000e+00 : f32
    %125 = vector.broadcast %cst_52 : f32 to vector<16x256xf32>
    %126 = arith.addf %125, %124 : vector<16x256xf32>
    %127 = arith.divf %125, %126 : vector<16x256xf32>
    %128 = arith.mulf %120, %127 : vector<16x256xf32>
    %129 = arith.truncf %128 : vector<16x256xf32> to vector<16x256xbf16>
    %c0_53 = arith.constant 0 : index
    %c0_54 = arith.constant 0 : index
    %c0_55 = arith.constant 0 : index
    %130 = vector.load %arg13[%c0_53, %c0_54, %c0_55] : memref<1x256x64xbf16, #tpu.memory_space<vmem>>, vector<1x256x64xbf16>
    %131 = vector.shape_cast %130 : vector<1x256x64xbf16> to vector<256x64xbf16>
    %cst_56 = arith.constant dense<0.000000e+00> : vector<16x64xf32>
    %132 = tpu.matmul %129, %131, %cst_56 {dimension_numbers = #tpu.dot_dimension_numbers<[1], [0], [0], [1], [0, 0, 1, 1], [], []>} : vector<16x256xbf16>, vector<256x64xbf16>, vector<16x64xf32> -> vector<16x64xf32>
    %c0_57 = arith.constant 0 : index
    %c0_58 = arith.constant 0 : index
    %c0_59 = arith.constant 0 : index
    %133 = vector.load %arg14[%c0_57, %c0_58, %c0_59] : memref<1x1x64xf32, #tpu.memory_space<vmem>>, vector<1x1x64xf32>
    %134 = vector.shape_cast %133 : vector<1x1x64xf32> to vector<1x64xf32>
    %135 = vector.broadcast %134 : vector<1x64xf32> to vector<16x64xf32>
    %136 = arith.addf %132, %135 : vector<16x64xf32>
    %137 = arith.addf %136, %86 : vector<16x64xf32>
    %c1_i32 = arith.constant 1 : i32
    %138 = arith.cmpi eq, %arg1, %c1_i32 : i32
    %139 = arith.extui %138 : i1 to i32
    %c0_i32_60 = arith.constant 0 : i32
    %140 = arith.cmpi ne, %139, %c0_i32_60 : i32
    scf.if %140 {
      %c0_63 = arith.constant 0 : index
      %c0_64 = arith.constant 0 : index
      %144 = vector.load %arg15[%c0_63, %c0_64] : memref<1x64xf32, #tpu.memory_space<vmem>>, vector<1x64xf32>
      %c0_65 = arith.constant 0 : index
      %c0_66 = arith.constant 0 : index
      %145 = vector.load %arg16[%c0_65, %c0_66] : memref<1x64xf32, #tpu.memory_space<vmem>>, vector<1x64xf32>
      %cst_67 = arith.constant dense<0.000000e+00> : vector<16xf32>
      %146 = vector.multi_reduction <add>, %137, %cst_67 [1] : vector<16x64xf32> to vector<16xf32>
      %147 = vector.shape_cast %146 : vector<16xf32> to vector<16x1xf32>
      %cst_68 = arith.constant 6.400000e+01 : f32
      %148 = vector.broadcast %cst_68 : f32 to vector<16x1xf32>
      %149 = arith.divf %147, %148 : vector<16x1xf32>
      %150 = vector.broadcast %149 : vector<16x1xf32> to vector<16x64xf32>
      %151 = arith.subf %137, %150 : vector<16x64xf32>
      %152 = arith.mulf %151, %151 : vector<16x64xf32>
      %cst_69 = arith.constant dense<0.000000e+00> : vector<16xf32>
      %153 = vector.multi_reduction <add>, %152, %cst_69 [1] : vector<16x64xf32> to vector<16xf32>
      %154 = vector.shape_cast %153 : vector<16xf32> to vector<16x1xf32>
      %cst_70 = arith.constant 6.400000e+01 : f32
      %155 = vector.broadcast %cst_70 : f32 to vector<16x1xf32>
      %156 = arith.divf %154, %155 : vector<16x1xf32>
      %157 = vector.broadcast %149 : vector<16x1xf32> to vector<16x64xf32>
      %158 = arith.subf %137, %157 : vector<16x64xf32>
      %cst_71 = arith.constant 9.99999974E-6 : f32
      %159 = vector.broadcast %cst_71 : f32 to vector<16x1xf32>
      %160 = arith.addf %156, %159 : vector<16x1xf32>
      %161 = math.rsqrt %160 : vector<16x1xf32>
      %162 = vector.broadcast %161 : vector<16x1xf32> to vector<16x64xf32>
      %163 = arith.mulf %158, %162 : vector<16x64xf32>
      %164 = vector.broadcast %144 : vector<1x64xf32> to vector<16x64xf32>
      %165 = arith.mulf %163, %164 : vector<16x64xf32>
      %166 = vector.broadcast %145 : vector<1x64xf32> to vector<16x64xf32>
      %167 = arith.addf %165, %166 : vector<16x64xf32>
      %168 = vector.shape_cast %167 : vector<16x64xf32> to vector<1x16x64xf32>
      %c0_72 = arith.constant 0 : index
      %c0_73 = arith.constant 0 : index
      %c0_74 = arith.constant 0 : index
      %169 = vector.load %arg17[%c0_72, %c0_73, %c0_74] : memref<1x16x64xf32, #tpu.memory_space<vmem>>, vector<1x16x64xf32>
      tpu.vector_store %arg17[%c0_72, %c0_73, %c0_74], %168 {strides = array<i32>} : memref<1x16x64xf32, #tpu.memory_space<vmem>>, vector<1x16x64xf32>,
    } else {
    }
    %c1_i32_61 = arith.constant 1 : i32
    %141 = arith.cmpi slt, %arg1, %c1_i32_61 : i32
    %142 = arith.extui %141 : i1 to i32
    %c0_i32_62 = arith.constant 0 : i32
    %143 = arith.cmpi ne, %142, %c0_i32_62 : i32
    scf.if %143 {
      %144 = vector.shape_cast %137 : vector<16x64xf32> to vector<1x16x64xf32>
      %c0_63 = arith.constant 0 : index
      %c0_64 = arith.constant 0 : index
      %c0_65 = arith.constant 0 : index
      %145 = vector.load %arg17[%c0_63, %c0_64, %c0_65] : memref<1x16x64xf32, #tpu.memory_space<vmem>>, vector<1x16x64xf32>
      tpu.vector_store %arg17[%c0_63, %c0_64, %c0_65], %144 {strides = array<i32>} : memref<1x16x64xf32, #tpu.memory_space<vmem>>, vector<1x16x64xf32>,
    } else {
    }
    return
  }
  func.func @transform_0(%arg0: i32, %arg1: i32) -> (i32, i32, i32) {
    %c0_i32 = arith.constant 0 : i32
    %c0_i32_0 = arith.constant 0 : i32
    %c0_i32_1 = arith.constant 0 : i32
    return %arg0, %c0_i32, %c0_i32_0 : i32, i32, i32
  }
  func.func @transform_1(%arg0: i32, %arg1: i32) -> (i32, i32, i32) {
    %c0_i32 = arith.constant 0 : i32
    %c0_i32_0 = arith.constant 0 : i32
    %c0_i32_1 = arith.constant 0 : i32
    return %arg1, %c0_i32, %c0_i32_0 : i32, i32, i32
  }
  func.func @transform_2(%arg0: i32, %arg1: i32) -> (i32, i32, i32) {
    %c0_i32 = arith.constant 0 : i32
    %c0_i32_0 = arith.constant 0 : i32
    %c0_i32_1 = arith.constant 0 : i32
    return %arg1, %c0_i32, %c0_i32_0 : i32, i32, i32
  }
  func.func @transform_3(%arg0: i32, %arg1: i32) -> (i32, i32, i32) {
    %c0_i32 = arith.constant 0 : i32
    %c0_i32_0 = arith.constant 0 : i32
    %c0_i32_1 = arith.constant 0 : i32
    return %arg1, %c0_i32, %c0_i32_0 : i32, i32, i32
  }
  func.func @transform_4(%arg0: i32, %arg1: i32) -> (i32, i32, i32) {
    %c0_i32 = arith.constant 0 : i32
    %c0_i32_0 = arith.constant 0 : i32
    %c0_i32_1 = arith.constant 0 : i32
    return %arg1, %c0_i32, %c0_i32_0 : i32, i32, i32
  }
  func.func @transform_5(%arg0: i32, %arg1: i32) -> (i32, i32, i32) {
    %c0_i32 = arith.constant 0 : i32
    %c0_i32_0 = arith.constant 0 : i32
    %c0_i32_1 = arith.constant 0 : i32
    return %arg1, %c0_i32, %c0_i32_0 : i32, i32, i32
  }
  func.func @transform_6(%arg0: i32, %arg1: i32) -> (i32, i32, i32) {
    %c0_i32 = arith.constant 0 : i32
    %c0_i32_0 = arith.constant 0 : i32
    %c0_i32_1 = arith.constant 0 : i32
    return %arg1, %c0_i32, %c0_i32_0 : i32, i32, i32
  }
  func.func @transform_7(%arg0: i32, %arg1: i32) -> (i32, i32, i32) {
    %c0_i32 = arith.constant 0 : i32
    %c0_i32_0 = arith.constant 0 : i32
    %c0_i32_1 = arith.constant 0 : i32
    return %arg1, %c0_i32, %c0_i32_0 : i32, i32, i32
  }
  func.func @transform_8(%arg0: i32, %arg1: i32) -> (i32, i32, i32) {
    %c0_i32 = arith.constant 0 : i32
    %c0_i32_0 = arith.constant 0 : i32
    %c0_i32_1 = arith.constant 0 : i32
    return %arg1, %c0_i32, %c0_i32_0 : i32, i32, i32
  }
  func.func @transform_9(%arg0: i32, %arg1: i32) -> (i32, i32, i32) {
    %c0_i32 = arith.constant 0 : i32
    %c0_i32_0 = arith.constant 0 : i32
    %c0_i32_1 = arith.constant 0 : i32
    return %arg1, %c0_i32, %c0_i32_0 : i32, i32, i32
  }
  func.func @transform_10(%arg0: i32, %arg1: i32) -> (i32, i32, i32) {
    %c0_i32 = arith.constant 0 : i32
    %c0_i32_0 = arith.constant 0 : i32
    %c0_i32_1 = arith.constant 0 : i32
    return %arg1, %c0_i32, %c0_i32_0 : i32, i32, i32
  }
  func.func @transform_11(%arg0: i32, %arg1: i32) -> (i32, i32, i32) {
    %c0_i32 = arith.constant 0 : i32
    %c0_i32_0 = arith.constant 0 : i32
    %c0_i32_1 = arith.constant 0 : i32
    return %arg1, %c0_i32, %c0_i32_0 : i32, i32, i32
  }
  func.func @transform_12(%arg0: i32, %arg1: i32) -> (i32, i32, i32) {
    %c0_i32 = arith.constant 0 : i32
    %c0_i32_0 = arith.constant 0 : i32
    %c0_i32_1 = arith.constant 0 : i32
    return %arg1, %c0_i32, %c0_i32_0 : i32, i32, i32
  }
  func.func @transform_13(%arg0: i32, %arg1: i32) -> (i32, i32) {
    %c0_i32 = arith.constant 0 : i32
    %c0_i32_0 = arith.constant 0 : i32
    %c0_i32_1 = arith.constant 0 : i32
    return %c0_i32, %c0_i32_0 : i32, i32
  }
  func.func @transform_14(%arg0: i32, %arg1: i32) -> (i32, i32) {
    %c0_i32 = arith.constant 0 : i32
    %c0_i32_0 = arith.constant 0 : i32
    %c0_i32_1 = arith.constant 0 : i32
    return %c0_i32, %c0_i32_0 : i32, i32
  }
  func.func @transform_15(%arg0: i32, %arg1: i32) -> (i32, i32, i32) {
    %c0_i32 = arith.constant 0 : i32
    %c0_i32_0 = arith.constant 0 : i32
    %c0_i32_1 = arith.constant 0 : i32
    return %arg0, %c0_i32, %c0_i32_0 : i32, i32, i32
  }
}

</mosaic_0001>

<llo_original>
// kernel: tpu_custom_call.1
$region0: #{tpu_custom_call.1}
  #allocation0 [shape = 'u32[]', space=smem, size = 0x4, offset = 0x4, fixed_abs, tag = 'smem constant byte address 0x4 - core index']
  #allocation1 [shape = 'u32[72,128]{1,0:T(1,128)}', space=vmem, size = 0x9000, scoped, tag = 'internal scratch']
  %s0 = inlined_call_operand.vmem [shape: f32[2,16,64], index: 0, kind: input, shape index: {}]
  %s1 = inlined_call_operand.vmem [shape: f32[2,1,64], index: 1, kind: input, shape index: {}]
  %s2 = inlined_call_operand.vmem [shape: f32[2,1,64], index: 2, kind: input, shape index: {}]
  %s3 = inlined_call_operand.vmem [shape: bf16[2,64,192], index: 3, kind: input, shape index: {}]
  %s4 = inlined_call_operand.vmem [shape: f32[2,1,192], index: 4, kind: input, shape index: {}]
  %s5 = inlined_call_operand.vmem [shape: bf16[2,64,64], index: 5, kind: input, shape index: {}]
  %s6 = inlined_call_operand.vmem [shape: f32[2,1,64], index: 6, kind: input, shape index: {}]
  %s7 = inlined_call_operand.vmem [shape: f32[2,1,64], index: 7, kind: input, shape index: {}]
  %s8 = inlined_call_operand.vmem [shape: f32[2,1,64], index: 8, kind: input, shape index: {}]
  %s9 = inlined_call_operand.vmem [shape: bf16[2,64,256], index: 9, kind: input, shape index: {}]
  %s10 = inlined_call_operand.vmem [shape: f32[2,1,256], index: 10, kind: input, shape index: {}]
  %s11 = inlined_call_operand.vmem [shape: bf16[2,256,64], index: 11, kind: input, shape index: {}]
  %s12 = inlined_call_operand.vmem [shape: f32[2,1,64], index: 12, kind: input, shape index: {}]
  %s13 = inlined_call_operand.vmem [shape: f32[1,64], index: 13, kind: input, shape index: {}]
  %s14 = inlined_call_operand.vmem [shape: f32[1,64], index: 14, kind: input, shape index: {}]
  %s15 = inlined_call_operand.hbm [shape: f32[2,16,64], index: 15, kind: output, shape index: {}]
  %s16 = sld [smem:[#allocation0]]
  $region105: #{tpu_custom_call.1} parent=0
    _
  %s18 = ssub.s32 1, %s16
  %s19 = scalar_select 0, %s18, %s16
  $region1: #{tpu_custom_call.1} parent=0
    #allocation2 [shape = 'u8[16384]{0}', space=vmem, size = 0x4000, scoped, tag = 'output window, operand 0']
    #allocation3 [shape = 's32[2]{0}', space=sflag, size = 0x8, scoped, tag = 'scoped memory for tpu_custom_call.1']
    %20 = vsyncpa [#allocation3], 0
    %s21 = scalar_lea.sflag [#allocation3], 1
    %22 = vsyncpa %s21, 0
    loop: start=0, step=1, limit=6
    $region2: #{tpu_custom_call.1} parent=1 // loop_pre_header
      _
    $region3: #{tpu_custom_call.1} parent=1 // loop_header
      %s24 = sphi 0, %s28
      %p25 = scmp.ge.s32.totalorder %s24, 6
      %s31 = sphi 0, %s43
      %s32 = sphi 0, %s39
      %s33 = sphi 0, %s31
      %s34 = sphi 0, %s32
      %s35 = sphi 0, %s33
      %s36 = sphi 0, %s34
      %s46 = sphi 0, %s48
      %s49 = sphi 0, %s46
      %s50 = sphi 0, %s49
      %s66 = sphi 0, %s50
      %s72 = sphi 0, %s74
      %s75 = sphi 0, %s72
      %s76 = sphi 0, %s75
      %s92 = sphi 0, %s76
      %s98 = sphi 0, %s100
      %s101 = sphi 0, %s98
      %s102 = sphi 0, %s101
      %s118 = sphi 0, %s102
      %s124 = sphi 0, %s126
      %s127 = sphi 0, %s124
      %s128 = sphi 0, %s127
      %s144 = sphi 0, %s128
      %s150 = sphi 0, %s152
      %s153 = sphi 0, %s150
      %s154 = sphi 0, %s153
      %s170 = sphi 0, %s154
      %s176 = sphi 0, %s178
      %s179 = sphi 0, %s176
      %s180 = sphi 0, %s179
      %s196 = sphi 0, %s180
      %s202 = sphi 0, %s204
      %s205 = sphi 0, %s202
      %s206 = sphi 0, %s205
      %s222 = sphi 0, %s206
      %s228 = sphi 0, %s230
      %s231 = sphi 0, %s228
      %s232 = sphi 0, %s231
      %s248 = sphi 0, %s232
      %s254 = sphi 0, %s256
      %s257 = sphi 0, %s254
      %s258 = sphi 0, %s257
      %s274 = sphi 0, %s258
      %s280 = sphi 0, %s282
      %s283 = sphi 0, %s280
      %s284 = sphi 0, %s283
      %s300 = sphi 0, %s284
      %s306 = sphi 0, %s308
      %s309 = sphi 0, %s306
      %s310 = sphi 0, %s309
      %s326 = sphi 0, %s310
      %s332 = sphi 0, %s334
      %s335 = sphi 0, %s332
      %s336 = sphi 0, %s335
      %s352 = sphi 0, %s336
      %s358 = sphi 0, %s360
      %s361 = sphi 0, %s358
      %s362 = sphi 0, %s361
      %s378 = sphi 0, %s362
      %s382 = sphi 0, %s382
      %s384 = sphi 0, %s382
      %s385 = sphi 0, %s384
      %s399 = sphi 0, %s385
      %s403 = sphi 0, %s403
      %s405 = sphi 0, %s403
      %s406 = sphi 0, %s405
      %s420 = sphi 0, %s406
      %s426 = sphi 0, %s428
      %s429 = sphi 0, %s426
      %s430 = sphi 0, %s429
      %s446 = sphi 0, %s430
    $region4: #{tpu_custom_call.1} parent=1 // loop_header_branch
      %27 = sbr.rel (%p25) target = $region8
    $region5: #{tpu_custom_call.1} parent=1 // loop_body
      %s29 = ssub.s32 %s24, 1
      %s30 = ssub.s32 %s24, 2
      %s37 = sadd.s32 1, %s32
      %p38 = scmp.ge.s32.totalorder %s37, 2
      %s39 = scalar_select %p38, 0, %s37
      %s40 = sadd.s32 1, %s31
      %s41 = scalar_select %p38, %s40, %s31
      %p42 = scmp.ge.s32.totalorder %s41, 2
      %s43 = scalar_select %p42, 0, %s41
      %s44 = ssub.s32 %s31, %s43
      %p45 = scmp.eq.s32.totalorder %s44, 0
      %s47 = sadd.s32 %s46, 1
      %s48 = scalar_select %p45, %s46, %s47
      %p51 = pneg %p45
      %p52 = scmp.eq.s32.totalorder %s24, 3
      %p53 = por %p51, %p52
      %p54 = scmp.ne.s32.totalorder %s46, %s49
      %p55 = scmp.eq.s32.totalorder %s24, 0
      %p56 = por %p54, %p55
      %p57 = scmp.ne.s32.totalorder %s46, %s49
      %p58 = scmp.eq.s32.totalorder %s29, 3
      %p59 = por %p57, %p58
      %p60 = scmp.ne.s32.totalorder %s49, %s50
      %p61 = scmp.eq.s32.totalorder %s29, 0
      %p62 = por %p60, %p61
      %p63 = scmp.ne.s32.totalorder %s49, %s50
      %p64 = scmp.eq.s32.totalorder %s30, 3
      %p65 = por %p63, %p64
      %p67 = scmp.ne.s32.totalorder %s50, %s66
      %p68 = scmp.eq.s32.totalorder %s30, 0
      %p69 = por %p67, %p68
      %s70 = ssub.s32 %s32, %s39
      %p71 = scmp.eq.s32.totalorder %s70, 0
      %s73 = sadd.s32 %s72, 1
      %s74 = scalar_select %p71, %s72, %s73
      %p77 = pneg %p71
      %p78 = scmp.eq.s32.totalorder %s24, 3
      %p79 = por %p77, %p78
      %p80 = scmp.ne.s32.totalorder %s72, %s75
      %p81 = scmp.eq.s32.totalorder %s24, 0
      %p82 = por %p80, %p81
      %p83 = scmp.ne.s32.totalorder %s72, %s75
      %p84 = scmp.eq.s32.totalorder %s29, 3
      %p85 = por %p83, %p84
      %p86 = scmp.ne.s32.totalorder %s75, %s76
      %p87 = scmp.eq.s32.totalorder %s29, 0
      %p88 = por %p86, %p87
      %p89 = scmp.ne.s32.totalorder %s75, %s76
      %p90 = scmp.eq.s32.totalorder %s30, 3
      %p91 = por %p89, %p90
      %p93 = scmp.ne.s32.totalorder %s76, %s92
      %p94 = scmp.eq.s32.totalorder %s30, 0
      %p95 = por %p93, %p94
      %s96 = ssub.s32 %s32, %s39
      %p97 = scmp.eq.s32.totalorder %s96, 0
      %s99 = sadd.s32 %s98, 1
      %s100 = scalar_select %p97, %s98, %s99
      %p103 = pneg %p97
      %p104 = scmp.eq.s32.totalorder %s24, 3
      %p105 = por %p103, %p104
      %p106 = scmp.ne.s32.totalorder %s98, %s101
      %p107 = scmp.eq.s32.totalorder %s24, 0
      %p108 = por %p106, %p107
      %p109 = scmp.ne.s32.totalorder %s98, %s101
      %p110 = scmp.eq.s32.totalorder %s29, 3
      %p111 = por %p109, %p110
      %p112 = scmp.ne.s32.totalorder %s101, %s102
      %p113 = scmp.eq.s32.totalorder %s29, 0
      %p114 = por %p112, %p113
      %p115 = scmp.ne.s32.totalorder %s101, %s102
      %p116 = scmp.eq.s32.totalorder %s30, 3
      %p117 = por %p115, %p116
      %p119 = scmp.ne.s32.totalorder %s102, %s118
      %p120 = scmp.eq.s32.totalorder %s30, 0
      %p121 = por %p119, %p120
      %s122 = ssub.s32 %s32, %s39
      %p123 = scmp.eq.s32.totalorder %s122, 0
      %s125 = sadd.s32 %s124, 1
      %s126 = scalar_select %p123, %s124, %s125
      %p129 = pneg %p123
      %p130 = scmp.eq.s32.totalorder %s24, 3
      %p131 = por %p129, %p130
      %p132 = scmp.ne.s32.totalorder %s124, %s127
      %p133 = scmp.eq.s32.totalorder %s24, 0
      %p134 = por %p132, %p133
      %p135 = scmp.ne.s32.totalorder %s124, %s127
      %p136 = scmp.eq.s32.totalorder %s29, 3
      %p137 = por %p135, %p136
      %p138 = scmp.ne.s32.totalorder %s127, %s128
      %p139 = scmp.eq.s32.totalorder %s29, 0
      %p140 = por %p138, %p139
      %p141 = scmp.ne.s32.totalorder %s127, %s128
      %p142 = scmp.eq.s32.totalorder %s30, 3
      %p143 = por %p141, %p142
      %p145 = scmp.ne.s32.totalorder %s128, %s144
      %p146 = scmp.eq.s32.totalorder %s30, 0
      %p147 = por %p145, %p146
      %s148 = ssub.s32 %s32, %s39
      %p149 = scmp.eq.s32.totalorder %s148, 0
      %s151 = sadd.s32 %s150, 1
      %s152 = scalar_select %p149, %s150, %s151
      %p155 = pneg %p149
      %p156 = scmp.eq.s32.totalorder %s24, 3
      %p157 = por %p155, %p156
      %p158 = scmp.ne.s32.totalorder %s150, %s153
      %p159 = scmp.eq.s32.totalorder %s24, 0
      %p160 = por %p158, %p159
      %p161 = scmp.ne.s32.totalorder %s150, %s153
      %p162 = scmp.eq.s32.totalorder %s29, 3
      %p163 = por %p161, %p162
      %p164 = scmp.ne.s32.totalorder %s153, %s154
      %p165 = scmp.eq.s32.totalorder %s29, 0
      %p166 = por %p164, %p165
      %p167 = scmp.ne.s32.totalorder %s153, %s154
      %p168 = scmp.eq.s32.totalorder %s30, 3
      %p169 = por %p167, %p168
      %p171 = scmp.ne.s32.totalorder %s154, %s170
      %p172 = scmp.eq.s32.totalorder %s30, 0
      %p173 = por %p171, %p172
      %s174 = ssub.s32 %s32, %s39
      %p175 = scmp.eq.s32.totalorder %s174, 0
      %s177 = sadd.s32 %s176, 1
      %s178 = scalar_select %p175, %s176, %s177
      %p181 = pneg %p175
      %p182 = scmp.eq.s32.totalorder %s24, 3
      %p183 = por %p181, %p182
      %p184 = scmp.ne.s32.totalorder %s176, %s179
      %p185 = scmp.eq.s32.totalorder %s24, 0
      %p186 = por %p184, %p185
      %p187 = scmp.ne.s32.totalorder %s176, %s179
      %p188 = scmp.eq.s32.totalorder %s29, 3
      %p189 = por %p187, %p188
      %p190 = scmp.ne.s32.totalorder %s179, %s180
      %p191 = scmp.eq.s32.totalorder %s29, 0
      %p192 = por %p190, %p191
      %p193 = scmp.ne.s32.totalorder %s179, %s180
      %p194 = scmp.eq.s32.totalorder %s30, 3
      %p195 = por %p193, %p194
      %p197 = scmp.ne.s32.totalorder %s180, %s196
      %p198 = scmp.eq.s32.totalorder %s30, 0
      %p199 = por %p197, %p198
      %s200 = ssub.s32 %s32, %s39
      %p201 = scmp.eq.s32.totalorder %s200, 0
      %s203 = sadd.s32 %s202, 1
      %s204 = scalar_select %p201, %s202, %s203
      %p207 = pneg %p201
      %p208 = scmp.eq.s32.totalorder %s24, 3
      %p209 = por %p207, %p208
      %p210 = scmp.ne.s32.totalorder %s202, %s205
      %p211 = scmp.eq.s32.totalorder %s24, 0
      %p212 = por %p210, %p211
      %p213 = scmp.ne.s32.totalorder %s202, %s205
      %p214 = scmp.eq.s32.totalorder %s29, 3
      %p215 = por %p213, %p214
      %p216 = scmp.ne.s32.totalorder %s205, %s206
      %p217 = scmp.eq.s32.totalorder %s29, 0
      %p218 = por %p216, %p217
      %p219 = scmp.ne.s32.totalorder %s205, %s206
      %p220 = scmp.eq.s32.totalorder %s30, 3
      %p221 = por %p219, %p220
      %p223 = scmp.ne.s32.totalorder %s206, %s222
      %p224 = scmp.eq.s32.totalorder %s30, 0
      %p225 = por %p223, %p224
      %s226 = ssub.s32 %s32, %s39
      %p227 = scmp.eq.s32.totalorder %s226, 0
      %s229 = sadd.s32 %s228, 1
      %s230 = scalar_select %p227, %s228, %s229
      %p233 = pneg %p227
      %p234 = scmp.eq.s32.totalorder %s24, 3
      %p235 = por %p233, %p234
      %p236 = scmp.ne.s32.totalorder %s228, %s231
      %p237 = scmp.eq.s32.totalorder %s24, 0
      %p238 = por %p236, %p237
      %p239 = scmp.ne.s32.totalorder %s228, %s231
      %p240 = scmp.eq.s32.totalorder %s29, 3
      %p241 = por %p239, %p240
      %p242 = scmp.ne.s32.totalorder %s231, %s232
      %p243 = scmp.eq.s32.totalorder %s29, 0
      %p244 = por %p242, %p243
      %p245 = scmp.ne.s32.totalorder %s231, %s232
      %p246 = scmp.eq.s32.totalorder %s30, 3
      %p247 = por %p245, %p246
      %p249 = scmp.ne.s32.totalorder %s232, %s248
      %p250 = scmp.eq.s32.totalorder %s30, 0
      %p251 = por %p249, %p250
      %s252 = ssub.s32 %s32, %s39
      %p253 = scmp.eq.s32.totalorder %s252, 0
      %s255 = sadd.s32 %s254, 1
      %s256 = scalar_select %p253, %s254, %s255
      %p259 = pneg %p253
      %p260 = scmp.eq.s32.totalorder %s24, 3
      %p261 = por %p259, %p260
      %p262 = scmp.ne.s32.totalorder %s254, %s257
      %p263 = scmp.eq.s32.totalorder %s24, 0
      %p264 = por %p262, %p263
      %p265 = scmp.ne.s32.totalorder %s254, %s257
      %p266 = scmp.eq.s32.totalorder %s29, 3
      %p267 = por %p265, %p266
      %p268 = scmp.ne.s32.totalorder %s257, %s258
      %p269 = scmp.eq.s32.totalorder %s29, 0
      %p270 = por %p268, %p269
      %p271 = scmp.ne.s32.totalorder %s257, %s258
      %p272 = scmp.eq.s32.totalorder %s30, 3
      %p273 = por %p271, %p272
      %p275 = scmp.ne.s32.totalorder %s258, %s274
      %p276 = scmp.eq.s32.totalorder %s30, 0
      %p277 = por %p275, %p276
      %s278 = ssub.s32 %s32, %s39
      %p279 = scmp.eq.s32.totalorder %s278, 0
      %s281 = sadd.s32 %s280, 1
      %s282 = scalar_select %p279, %s280, %s281
      %p285 = pneg %p279
      %p286 = scmp.eq.s32.totalorder %s24, 3
      %p287 = por %p285, %p286
      %p288 = scmp.ne.s32.totalorder %s280, %s283
      %p289 = scmp.eq.s32.totalorder %s24, 0
      %p290 = por %p288, %p289
      %p291 = scmp.ne.s32.totalorder %s280, %s283
      %p292 = scmp.eq.s32.totalorder %s29, 3
      %p293 = por %p291, %p292
      %p294 = scmp.ne.s32.totalorder %s283, %s284
      %p295 = scmp.eq.s32.totalorder %s29, 0
      %p296 = por %p294, %p295
      %p297 = scmp.ne.s32.totalorder %s283, %s284
      %p298 = scmp.eq.s32.totalorder %s30, 3
      %p299 = por %p297, %p298
      %p301 = scmp.ne.s32.totalorder %s284, %s300
      %p302 = scmp.eq.s32.totalorder %s30, 0
      %p303 = por %p301, %p302
      %s304 = ssub.s32 %s32, %s39
      %p305 = scmp.eq.s32.totalorder %s304, 0
      %s307 = sadd.s32 %s306, 1
      %s308 = scalar_select %p305, %s306, %s307
      %p311 = pneg %p305
      %p312 = scmp.eq.s32.totalorder %s24, 3
      %p313 = por %p311, %p312
      %p314 = scmp.ne.s32.totalorder %s306, %s309
      %p315 = scmp.eq.s32.totalorder %s24, 0
      %p316 = por %p314, %p315
      %p317 = scmp.ne.s32.totalorder %s306, %s309
      %p318 = scmp.eq.s32.totalorder %s29, 3
      %p319 = por %p317, %p318
      %p320 = scmp.ne.s32.totalorder %s309, %s310
      %p321 = scmp.eq.s32.totalorder %s29, 0
      %p322 = por %p320, %p321
      %p323 = scmp.ne.s32.totalorder %s309, %s310
      %p324 = scmp.eq.s32.totalorder %s30, 3
      %p325 = por %p323, %p324
      %p327 = scmp.ne.s32.totalorder %s310, %s326
      %p328 = scmp.eq.s32.totalorder %s30, 0
      %p329 = por %p327, %p328
      %s330 = ssub.s32 %s32, %s39
      %p331 = scmp.eq.s32.totalorder %s330, 0
      %s333 = sadd.s32 %s332, 1
      %s334 = scalar_select %p331, %s332, %s333
      %p337 = pneg %p331
      %p338 = scmp.eq.s32.totalorder %s24, 3
      %p339 = por %p337, %p338
      %p340 = scmp.ne.s32.totalorder %s332, %s335
      %p341 = scmp.eq.s32.totalorder %s24, 0
      %p342 = por %p340, %p341
      %p343 = scmp.ne.s32.totalorder %s332, %s335
      %p344 = scmp.eq.s32.totalorder %s29, 3
      %p345 = por %p343, %p344
      %p346 = scmp.ne.s32.totalorder %s335, %s336
      %p347 = scmp.eq.s32.totalorder %s29, 0
      %p348 = por %p346, %p347
      %p349 = scmp.ne.s32.totalorder %s335, %s336
      %p350 = scmp.eq.s32.totalorder %s30, 3
      %p351 = por %p349, %p350
      %p353 = scmp.ne.s32.totalorder %s336, %s352
      %p354 = scmp.eq.s32.totalorder %s30, 0
      %p355 = por %p353, %p354
      %s356 = ssub.s32 %s32, %s39
      %p357 = scmp.eq.s32.totalorder %s356, 0
      %s359 = sadd.s32 %s358, 1
      %s360 = scalar_select %p357, %s358, %s359
      %p363 = pneg %p357
      %p364 = scmp.eq.s32.totalorder %s24, 3
      %p365 = por %p363, %p364
      %p366 = scmp.ne.s32.totalorder %s358, %s361
      %p367 = scmp.eq.s32.totalorder %s24, 0
      %p368 = por %p366, %p367
      %p369 = scmp.ne.s32.totalorder %s358, %s361
      %p370 = scmp.eq.s32.totalorder %s29, 3
      %p371 = por %p369, %p370
      %p372 = scmp.ne.s32.totalorder %s361, %s362
      %p373 = scmp.eq.s32.totalorder %s29, 0
      %p374 = por %p372, %p373
      %p375 = scmp.ne.s32.totalorder %s361, %s362
      %p376 = scmp.eq.s32.totalorder %s30, 3
      %p377 = por %p375, %p376
      %p379 = scmp.ne.s32.totalorder %s362, %s378
      %p380 = scmp.eq.s32.totalorder %s30, 0
      %p381 = por %p379, %p380
      %s383 = sadd.s32 %s382, 1
      %p386 = scmp.eq.s32.totalorder %s24, 3
      %p387 = scmp.ne.s32.totalorder %s382, %s384
      %p388 = scmp.eq.s32.totalorder %s24, 0
      %p389 = por %p387, %p388
      %p390 = scmp.ne.s32.totalorder %s382, %s384
      %p391 = scmp.eq.s32.totalorder %s29, 3
      %p392 = por %p390, %p391
      %p393 = scmp.ne.s32.totalorder %s384, %s385
      %p394 = scmp.eq.s32.totalorder %s29, 0
      %p395 = por %p393, %p394
      %p396 = scmp.ne.s32.totalorder %s384, %s385
      %p397 = scmp.eq.s32.totalorder %s30, 3
      %p398 = por %p396, %p397
      %p400 = scmp.ne.s32.totalorder %s385, %s399
      %p401 = scmp.eq.s32.totalorder %s30, 0
      %p402 = por %p400, %p401
      %s404 = sadd.s32 %s403, 1
      %p407 = scmp.eq.s32.totalorder %s24, 3
      %p408 = scmp.ne.s32.totalorder %s403, %s405
      %p409 = scmp.eq.s32.totalorder %s24, 0
      %p410 = por %p408, %p409
      %p411 = scmp.ne.s32.totalorder %s403, %s405
      %p412 = scmp.eq.s32.totalorder %s29, 3
      %p413 = por %p411, %p412
      %p414 = scmp.ne.s32.totalorder %s405, %s406
      %p415 = scmp.eq.s32.totalorder %s29, 0
      %p416 = por %p414, %p415
      %p417 = scmp.ne.s32.totalorder %s405, %s406
      %p418 = scmp.eq.s32.totalorder %s30, 3
      %p419 = por %p417, %p418
      %p421 = scmp.ne.s32.totalorder %s406, %s420
      %p422 = scmp.eq.s32.totalorder %s30, 0
      %p423 = por %p421, %p422
      %s424 = ssub.s32 %s31, %s43
      %p425 = scmp.eq.s32.totalorder %s424, 0
      %s427 = sadd.s32 %s426, 1
      %s428 = scalar_select %p425, %s426, %s427
      %p431 = pneg %p425
      %p432 = scmp.eq.s32.totalorder %s24, 3
      %p433 = por %p431, %p432
      %p434 = scmp.ne.s32.totalorder %s426, %s429
      %p435 = scmp.eq.s32.totalorder %s24, 0
      %p436 = por %p434, %p435
      %p437 = scmp.ne.s32.totalorder %s426, %s429
      %p438 = scmp.eq.s32.totalorder %s29, 3
      %p439 = por %p437, %p438
      %p440 = scmp.ne.s32.totalorder %s429, %s430
      %p441 = scmp.eq.s32.totalorder %s29, 0
      %p442 = por %p440, %p441
      %p443 = scmp.ne.s32.totalorder %s429, %s430
      %p444 = scmp.eq.s32.totalorder %s30, 3
      %p445 = por %p443, %p444
      %p447 = scmp.ne.s32.totalorder %s430, %s446
      %p448 = scmp.eq.s32.totalorder %s30, 0
      %p449 = por %p447, %p448
      %p450 = scmp.le.s32.totalorder 1, %s24
      %p451 = scmp.lt.s32.totalorder %s24, 5
      %p452 = pnand %p450, %p451
      %p453 = pneg %p452
      // Predicated region
      $region9: #{tpu_custom_call.1} parent=5 // pred_check
        _
      $region10: #{tpu_custom_call.1} parent=5 // pred_check_branch
        %455 = sbr.rel (%p452) target = $region12
      $region11: #{tpu_custom_call.1} parent=5 // pred_region
        %s456 = ssub.s32 %s24, 1
        // Predicated region
        $region13: #{tpu_custom_call.1} parent=11 // pred_check
          %p457 = pneg %p395
        $region14: #{tpu_custom_call.1} parent=11 // pred_check_branch
          %459 = sbr.rel (%p457) target = $region16
        $region15: #{tpu_custom_call.1} parent=11 // pred_region
          _
        $region16: #{tpu_custom_call.1} parent=11 // pred_fallthru
          _
        // Predicated region
        $region17: #{tpu_custom_call.1} parent=11 // pred_check
          %p460 = pneg %p416
        $region18: #{tpu_custom_call.1} parent=11 // pred_check_branch
          %462 = sbr.rel (%p460) target = $region20
        $region19: #{tpu_custom_call.1} parent=11 // pred_region
          _
        $region20: #{tpu_custom_call.1} parent=11 // pred_fallthru
          _
      $region12: #{tpu_custom_call.1} parent=5 // pred_fallthru
        _
      %p463 = scmp.lt.s32.totalorder %s24, 4
      // Predicated region
      $region21: #{tpu_custom_call.1} parent=5 // pred_check
        %p464 = pneg %p463
      $region22: #{tpu_custom_call.1} parent=5 // pred_check_branch
        %466 = sbr.rel (%p464) target = $region24
      $region23: #{tpu_custom_call.1} parent=5 // pred_region
        // Predicated region
        $region25: #{tpu_custom_call.1} parent=23 // pred_check
          %p467 = pneg %p56
        $region26: #{tpu_custom_call.1} parent=23 // pred_check_branch
          %469 = sbr.rel (%p467) target = $region28
        $region27: #{tpu_custom_call.1} parent=23 // pred_region
          %p470 = scmp.lt.s32.totalorder %s31, 1
          %s471 = scalar_select %p470, %s31, 1
          %s472 = smul.addr %s471, 2
          %s473 = smul.addr %s472, 8
          %s474 = scalar_lea.vmem %s0, %s473
        $region28: #{tpu_custom_call.1} parent=23 // pred_fallthru
          _
        // Predicated region
        $region29: #{tpu_custom_call.1} parent=23 // pred_check
          %p475 = pneg %p82
        $region30: #{tpu_custom_call.1} parent=23 // pred_check_branch
          %477 = sbr.rel (%p475) target = $region32
        $region31: #{tpu_custom_call.1} parent=23 // pred_region
          %p478 = scmp.lt.s32.totalorder %s32, 1
          %s479 = scalar_select %p478, %s32, 1
          %s480 = scalar_lea.vmem %s1, %s479
        $region32: #{tpu_custom_call.1} parent=23 // pred_fallthru
          _
        // Predicated region
        $region33: #{tpu_custom_call.1} parent=23 // pred_check
          %p481 = pneg %p108
        $region34: #{tpu_custom_call.1} parent=23 // pred_check_branch
          %483 = sbr.rel (%p481) target = $region36
        $region35: #{tpu_custom_call.1} parent=23 // pred_region
          %p484 = scmp.lt.s32.totalorder %s32, 1
          %s485 = scalar_select %p484, %s32, 1
          %s486 = scalar_lea.vmem %s2, %s485
        $region36: #{tpu_custom_call.1} parent=23 // pred_fallthru
          _
        // Predicated region
        $region37: #{tpu_custom_call.1} parent=23 // pred_check
          %p487 = pneg %p134
        $region38: #{tpu_custom_call.1} parent=23 // pred_check_branch
          %489 = sbr.rel (%p487) target = $region40
        $region39: #{tpu_custom_call.1} parent=23 // pred_region
          %p490 = scmp.lt.s32.totalorder %s32, 1
          %s491 = scalar_select %p490, %s32, 1
          %s492 = smul.addr %s491, 16
          %s493 = smul.addr %s492, 4
          %s494 = scalar_lea.vmem %s3, %s493
        $region40: #{tpu_custom_call.1} parent=23 // pred_fallthru
          _
        // Predicated region
        $region41: #{tpu_custom_call.1} parent=23 // pred_check
          %p495 = pneg %p160
        $region42: #{tpu_custom_call.1} parent=23 // pred_check_branch
          %497 = sbr.rel (%p495) target = $region44
        $region43: #{tpu_custom_call.1} parent=23 // pred_region
          %p498 = scmp.lt.s32.totalorder %s32, 1
          %s499 = scalar_select %p498, %s32, 1
          %s500 = smul.addr %s499, 2
          %s501 = scalar_lea.vmem %s4, %s500
        $region44: #{tpu_custom_call.1} parent=23 // pred_fallthru
          _
        // Predicated region
        $region45: #{tpu_custom_call.1} parent=23 // pred_check
          %p502 = pneg %p186
        $region46: #{tpu_custom_call.1} parent=23 // pred_check_branch
          %504 = sbr.rel (%p502) target = $region48
        $region47: #{tpu_custom_call.1} parent=23 // pred_region
          %p505 = scmp.lt.s32.totalorder %s32, 1
          %s506 = scalar_select %p505, %s32, 1
          %s507 = smul.addr %s506, 8
          %s508 = smul.addr %s507, 4
          %s509 = scalar_lea.vmem %s5, %s508
        $region48: #{tpu_custom_call.1} parent=23 // pred_fallthru
          _
        // Predicated region
        $region49: #{tpu_custom_call.1} parent=23 // pred_check
          %p510 = pneg %p212
        $region50: #{tpu_custom_call.1} parent=23 // pred_check_branch
          %512 = sbr.rel (%p510) target = $region52
        $region51: #{tpu_custom_call.1} parent=23 // pred_region
          %p513 = scmp.lt.s32.totalorder %s32, 1
          %s514 = scalar_select %p513, %s32, 1
          %s515 = scalar_lea.vmem %s6, %s514
        $region52: #{tpu_custom_call.1} parent=23 // pred_fallthru
          _
        // Predicated region
        $region53: #{tpu_custom_call.1} parent=23 // pred_check
          %p516 = pneg %p238
        $region54: #{tpu_custom_call.1} parent=23 // pred_check_branch
          %518 = sbr.rel (%p516) target = $region56
        $region55: #{tpu_custom_call.1} parent=23 // pred_region
          %p519 = scmp.lt.s32.totalorder %s32, 1
          %s520 = scalar_select %p519, %s32, 1
          %s521 = scalar_lea.vmem %s7, %s520
        $region56: #{tpu_custom_call.1} parent=23 // pred_fallthru
          _
        // Predicated region
        $region57: #{tpu_custom_call.1} parent=23 // pred_check
          %p522 = pneg %p264
        $region58: #{tpu_custom_call.1} parent=23 // pred_check_branch
          %524 = sbr.rel (%p522) target = $region60
        $region59: #{tpu_custom_call.1} parent=23 // pred_region
          %p525 = scmp.lt.s32.totalorder %s32, 1
          %s526 = scalar_select %p525, %s32, 1
          %s527 = scalar_lea.vmem %s8, %s526
        $region60: #{tpu_custom_call.1} parent=23 // pred_fallthru
          _
        // Predicated region
        $region61: #{tpu_custom_call.1} parent=23 // pred_check
          %p528 = pneg %p290
        $region62: #{tpu_custom_call.1} parent=23 // pred_check_branch
          %530 = sbr.rel (%p528) target = $region64
        $region63: #{tpu_custom_call.1} parent=23 // pred_region
          %p531 = scmp.lt.s32.totalorder %s32, 1
          %s532 = scalar_select %p531, %s32, 1
          %s533 = smul.addr %s532, 16
          %s534 = smul.addr %s533, 4
          %s535 = scalar_lea.vmem %s9, %s534
        $region64: #{tpu_custom_call.1} parent=23 // pred_fallthru
          _
        // Predicated region
        $region65: #{tpu_custom_call.1} parent=23 // pred_check
          %p536 = pneg %p316
        $region66: #{tpu_custom_call.1} parent=23 // pred_check_branch
          %538 = sbr.rel (%p536) target = $region68
        $region67: #{tpu_custom_call.1} parent=23 // pred_region
          %p539 = scmp.lt.s32.totalorder %s32, 1
          %s540 = scalar_select %p539, %s32, 1
          %s541 = smul.addr %s540, 2
          %s542 = scalar_lea.vmem %s10, %s541
        $region68: #{tpu_custom_call.1} parent=23 // pred_fallthru
          _
        // Predicated region
        $region69: #{tpu_custom_call.1} parent=23 // pred_check
          %p543 = pneg %p342
        $region70: #{tpu_custom_call.1} parent=23 // pred_check_branch
          %545 = sbr.rel (%p543) target = $region72
        $region71: #{tpu_custom_call.1} parent=23 // pred_region
          %p546 = scmp.lt.s32.totalorder %s32, 1
          %s547 = scalar_select %p546, %s32, 1
          %s548 = smul.addr %s547, 32
          %s549 = smul.addr %s548, 4
          %s550 = scalar_lea.vmem %s11, %s549
        $region72: #{tpu_custom_call.1} parent=23 // pred_fallthru
          _
        // Predicated region
        $region73: #{tpu_custom_call.1} parent=23 // pred_check
          %p551 = pneg %p368
        $region74: #{tpu_custom_call.1} parent=23 // pred_check_branch
          %553 = sbr.rel (%p551) target = $region76
        $region75: #{tpu_custom_call.1} parent=23 // pred_region
          %p554 = scmp.lt.s32.totalorder %s32, 1
          %s555 = scalar_select %p554, %s32, 1
          %s556 = scalar_lea.vmem %s12, %s555
        $region76: #{tpu_custom_call.1} parent=23 // pred_fallthru
          _
      $region24: #{tpu_custom_call.1} parent=5 // pred_fallthru
        _
      %p557 = scmp.le.s32.totalorder 1, %s24
      %p558 = scmp.lt.s32.totalorder %s24, 5
      %p559 = pnand %p557, %p558
      %p560 = pneg %p559
      // Predicated region
      $region77: #{tpu_custom_call.1} parent=5 // pred_check
        _
      $region78: #{tpu_custom_call.1} parent=5 // pred_check_branch
        %562 = sbr.rel (%p559) target = $region80
      $region79: #{tpu_custom_call.1} parent=5 // pred_region
        %s563 = ssub.s32 %s24, 1
        %p564 = scmp.lt.s32.totalorder %s33, 1
        %s565 = scalar_select %p564, %s33, 1
        %s566 = smul.addr %s565, 2
        %s567 = smul.addr %s566, 8
        %s568 = scalar_lea.vmem %s0, %s567
        %p569 = pneg %p62
        %p570 = pneg %p59
        %p571 = scmp.lt.s32.totalorder %s34, 1
        %s572 = scalar_select %p571, %s34, 1
        %s573 = scalar_lea.vmem %s1, %s572
        %p574 = pneg %p88
        %p575 = pneg %p85
        %p576 = scmp.lt.s32.totalorder %s34, 1
        %s577 = scalar_select %p576, %s34, 1
        %s578 = scalar_lea.vmem %s2, %s577
        %p579 = pneg %p114
        %p580 = pneg %p111
        %p581 = scmp.lt.s32.totalorder %s34, 1
        %s582 = scalar_select %p581, %s34, 1
        %s583 = smul.addr %s582, 16
        %s584 = smul.addr %s583, 4
        %s585 = scalar_lea.vmem %s3, %s584
        %p586 = pneg %p140
        %p587 = pneg %p137
        %p588 = scmp.lt.s32.totalorder %s34, 1
        %s589 = scalar_select %p588, %s34, 1
        %s590 = smul.addr %s589, 2
        %s591 = scalar_lea.vmem %s4, %s590
        %p592 = pneg %p166
        %p593 = pneg %p163
        %p594 = scmp.lt.s32.totalorder %s34, 1
        %s595 = scalar_select %p594, %s34, 1
        %s596 = smul.addr %s595, 8
        %s597 = smul.addr %s596, 4
        %s598 = scalar_lea.vmem %s5, %s597
        %p599 = pneg %p192
        %p600 = pneg %p189
        %p601 = scmp.lt.s32.totalorder %s34, 1
        %s602 = scalar_select %p601, %s34, 1
        %s603 = scalar_lea.vmem %s6, %s602
        %p604 = pneg %p218
        %p605 = pneg %p215
        %p606 = scmp.lt.s32.totalorder %s34, 1
        %s607 = scalar_select %p606, %s34, 1
        %s608 = scalar_lea.vmem %s7, %s607
        %p609 = pneg %p244
        %p610 = pneg %p241
        %p611 = scmp.lt.s32.totalorder %s34, 1
        %s612 = scalar_select %p611, %s34, 1
        %s613 = scalar_lea.vmem %s8, %s612
        %p614 = pneg %p270
        %p615 = pneg %p267
        %p616 = scmp.lt.s32.totalorder %s34, 1
        %s617 = scalar_select %p616, %s34, 1
        %s618 = smul.addr %s617, 16
        %s619 = smul.addr %s618, 4
        %s620 = scalar_lea.vmem %s9, %s619
        %p621 = pneg %p296
        %p622 = pneg %p293
        %p623 = scmp.lt.s32.totalorder %s34, 1
        %s624 = scalar_select %p623, %s34, 1
        %s625 = smul.addr %s624, 2
        %s626 = scalar_lea.vmem %s10, %s625
        %p627 = pneg %p322
        %p628 = pneg %p319
        %p629 = scmp.lt.s32.totalorder %s34, 1
        %s630 = scalar_select %p629, %s34, 1
        %s631 = smul.addr %s630, 32
        %s632 = smul.addr %s631, 4
        %s633 = scalar_lea.vmem %s11, %s632
        %p634 = pneg %p348
        %p635 = pneg %p345
        %p636 = scmp.lt.s32.totalorder %s34, 1
        %s637 = scalar_select %p636, %s34, 1
        %s638 = scalar_lea.vmem %s12, %s637
        %p639 = pneg %p374
        %p640 = pneg %p371
        %p641 = pneg %p395
        %p642 = pneg %p392
        %p643 = pneg %p416
        %p644 = pneg %p413
        %p645 = pneg %p442
        %p646 = pneg %p439
        %s647 = sand.u32 %s429, 1
        %s648 = scalar_lea.sflag [#allocation3], %s647
        %s649 = sand.u32 %s429, 1
        %s650 = smul.addr %s649, 16
        %s651 = scalar_lea.vmem [#allocation2], %s650
        %p652 = scmp.lt.s32.totalorder %s33, 1
        %s653 = scalar_select %p652, %s33, 1
        %s654 = smul.addr %s653, 2
        %s655 = smul.addr %s654, 8
        %s656 = scalar_lea.vmem %s0, %s655
        %p657 = scmp.lt.s32.totalorder %s34, 1
        %s658 = scalar_select %p657, %s34, 1
        %s659 = scalar_lea.vmem %s1, %s658
        %p660 = scmp.lt.s32.totalorder %s34, 1
        %s661 = scalar_select %p660, %s34, 1
        %s662 = scalar_lea.vmem %s2, %s661
        %p663 = scmp.lt.s32.totalorder %s34, 1
        %s664 = scalar_select %p663, %s34, 1
        %s665 = smul.addr %s664, 16
        %s666 = smul.addr %s665, 4
        %s667 = scalar_lea.vmem %s3, %s666
        %p668 = scmp.lt.s32.totalorder %s34, 1
        %s669 = scalar_select %p668, %s34, 1
        %s670 = smul.addr %s669, 2
        %s671 = scalar_lea.vmem %s4, %s670
        %p672 = scmp.lt.s32.totalorder %s34, 1
        %s673 = scalar_select %p672, %s34, 1
        %s674 = smul.addr %s673, 8
        %s675 = smul.addr %s674, 4
        %s676 = scalar_lea.vmem %s5, %s675
        %p677 = scmp.lt.s32.totalorder %s34, 1
        %s678 = scalar_select %p677, %s34, 1
        %s679 = scalar_lea.vmem %s6, %s678
        %p680 = scmp.lt.s32.totalorder %s34, 1
        %s681 = scalar_select %p680, %s34, 1
        %s682 = scalar_lea.vmem %s7, %s681
        %p683 = scmp.lt.s32.totalorder %s34, 1
        %s684 = scalar_select %p683, %s34, 1
        %s685 = scalar_lea.vmem %s8, %s684
        %p686 = scmp.lt.s32.totalorder %s34, 1
        %s687 = scalar_select %p686, %s34, 1
        %s688 = smul.addr %s687, 16
        %s689 = smul.addr %s688, 4
        %s690 = scalar_lea.vmem %s9, %s689
        %p691 = scmp.lt.s32.totalorder %s34, 1
        %s692 = scalar_select %p691, %s34, 1
        %s693 = smul.addr %s692, 2
        %s694 = scalar_lea.vmem %s10, %s693
        %p695 = scmp.lt.s32.totalorder %s34, 1
        %s696 = scalar_select %p695, %s34, 1
        %s697 = smul.addr %s696, 32
        %s698 = smul.addr %s697, 4
        %s699 = scalar_lea.vmem %s11, %s698
        %p700 = scmp.lt.s32.totalorder %s34, 1
        %s701 = scalar_select %p700, %s34, 1
        %s702 = scalar_lea.vmem %s12, %s701
        %p704 = scmp.eq.s32.totalorder %s34, 0
        // Predicated region
        $region81: #{tpu_custom_call.1} parent=79 // pred_check
          %p705 = pneg %p704
        $region82: #{tpu_custom_call.1} parent=79 // pred_check_branch
          %707 = sbr.rel (%p705) target = $region84
        $region83: #{tpu_custom_call.1} parent=79 // pred_region
          %v708 = vld [vmem:[%s656] sm:$0xff]
          %v709 = vld [vmem:[%s656 + $0x8] sm:$0xff]
          %vm710 = vcmask 523264
          %711 = vst.msk [vmem:[%s651] sm:$0xff] %vm710, %v708
          %712 = vst.msk [vmem:[%s651 + $0x8] sm:$0xff] %vm710, %v709
        $region84: #{tpu_custom_call.1} parent=79 // pred_fallthru
          _
        %v713 = vld [vmem:[%s651] sm:$0xff]
        %v714 = vld [vmem:[%s651 + $0x8] sm:$0xff]
        %v715 = vld [vmem:[%s659] sm:$0x1]
        %v716 = vld [vmem:[%s662] sm:$0x1]
        %vm717 = vcmask 523264
        %v718 = vsel %vm717, %v713, 0.0
        %719 = vadd.xlane.f32.xlu0 %v718
        %v720 = vpop.xlane.xlu0 %719
        %v721 = vsel %vm717, %v714, 0.0
        %722 = vadd.xlane.f32.xlu0 %v721
        %v723 = vpop.xlane.xlu0 %722
        %v724 = vrcp.pop 64.0
        %v725 = vmul.f32 64.0, %v724
        %v726 = vsub.f32 1.0, %v725
        %v727 = vmul.f32 %v724, %v726
        %v728 = vadd.f32 %v724, %v727
        %vm729 = vweird.f32 %v724
        %v730 = vsel %vm729, %v724, %v728
        %v731 = vmul.f32 %v720, %v730
        %v732 = vmul.f32 %v723, %v730
        %v733 = vsub.f32 %v713, %v731
        %v734 = vsub.f32 %v714, %v732
        %v735 = vmul.f32 %v733, %v733
        %v736 = vmul.f32 %v734, %v734
        %v737 = vsel %vm717, %v735, 0.0
        %738 = vadd.xlane.f32.xlu0 %v737
        %v739 = vpop.xlane.xlu0 %738
        %v740 = vsel %vm717, %v736, 0.0
        %741 = vadd.xlane.f32.xlu0 %v740
        %v742 = vpop.xlane.xlu0 %741
        %v743 = vmul.f32 %v739, %v730
        %v744 = vmul.f32 %v742, %v730
        %v745 = vadd.f32 %v743, 1e-05
        %v746 = vadd.f32 %v744, 1e-05
        %v747 = vrsqrt.pop %v745
        %v748 = vmul.f32 %v747, %v745
        %v749 = vmul.f32 %v748, %v747
        %v750 = vmul.f32 0.5, %v749
        %v751 = vsub.f32 1.5, %v750
        %v752 = vmul.f32 %v747, %v751
        %vm753 = vweird.f32 %v745
        %vm754 = vweird.f32 %v747
        %vm755 = vmor %vm753, %vm754
        %v756 = vsel %vm755, %v747, %v752
        %v757 = vrsqrt.pop %v746
        %v758 = vmul.f32 %v757, %v746
        %v759 = vmul.f32 %v758, %v757
        %v760 = vmul.f32 0.5, %v759
        %v761 = vsub.f32 1.5, %v760
        %v762 = vmul.f32 %v757, %v761
        %vm763 = vweird.f32 %v746
        %vm764 = vweird.f32 %v757
        %vm765 = vmor %vm763, %vm764
        %v766 = vsel %vm765, %v757, %v762
        %v767 = vmul.f32 %v733, %v756
        %v768 = vmul.f32 %v734, %v766
        %v770 = vperm.slane %v715, 0
        %v772 = vmul.f32 %v767, %v770
        %v773 = vmul.f32 %v768, %v770
        %v775 = vperm.slane %v716, 0
        %v777 = vadd.f32 %v772, %v775
        %v778 = vadd.f32 %v773, %v775
        %v779 = vpack.c.bf16 %v778, %v777
        %v780 = vld [vmem:[%s667] sm:$0xff]
        %v781 = vld [vmem:[%s667 + $0x8] sm:$0xff]
        %v782 = vld [vmem:[%s667 + $0x10] sm:$0xff]
        %v783 = vld [vmem:[%s667 + $0x18] sm:$0xff]
        %v784 = vld [vmem:[%s667 + $0x20] sm:$0xff]
        %v785 = vld [vmem:[%s667 + $0x28] sm:$0xff]
        %v786 = vld [vmem:[%s667 + $0x30] sm:$0xff]
        %v787 = vld [vmem:[%s667 + $0x38] sm:$0xff]
        %v788 = vld [vmem:[%s671] sm:$0x3]
        %v790 = vperm.slane %v788, 0
        %v791 = vperm.slane %v788, 1
        %v802 = vunpack.c.l.b16 %v780
        %v803 = vunpack.c.h.b16 %v780
        %v804 = vunpack.c.l.b16 %v781
        %v805 = vunpack.c.h.b16 %v781
        %v806 = vunpack.c.l.b16 %v782
        %v807 = vunpack.c.h.b16 %v782
        %v808 = vunpack.c.l.b16 %v783
        %v809 = vunpack.c.h.b16 %v783
        %v810 = vunpack.c.l.b16 %v784
        %v811 = vunpack.c.h.b16 %v784
        %v812 = vunpack.c.l.b16 %v785
        %v813 = vunpack.c.h.b16 %v785
        %v814 = vunpack.c.l.b16 %v786
        %v815 = vunpack.c.h.b16 %v786
        %v816 = vunpack.c.l.b16 %v787
        %v817 = vunpack.c.h.b16 %v787
        %v818 = vpack.c.b16 %v804, %v802
        %v819 = vpack.c.b16 %v805, %v803
        %v820 = vpack.c.b16 %v808, %v806
        %v821 = vpack.c.b16 %v809, %v807
        %v822 = vpack.c.b16 %v812, %v810
        %v823 = vpack.c.b16 %v813, %v811
        %v824 = vpack.c.b16 %v816, %v814
        %v825 = vpack.c.b16 %v817, %v815
        %v835 = vsel %vm717, %v779, 0
        %837 = vmatpush.bf16.msra.mxu0 0
        %838 = vmatpush.bf16.msra.mxu0 0
        %839 = vmatpush.bf16.msra.mxu0 0
        %840 = vmatpush.bf16.msra.mxu0 0
        %841 = vmatpush.bf16.msra.mxu0 %v824
        %842 = vmatpush.bf16.msra.mxu0 %v822
        %843 = vmatpush.bf16.msra.mxu0 %v820
        %844 = vmatpush.bf16.msra.mxu0 %v818
        %845 = vmatmul.bf16.gmra.mxu0 %v835
        %v846 = vpop.f32.mrf.mxu0
        %v847 = vadd.f32 %v790, %v846
        %v848 = vpop.f32.mrf.mxu0
        %v849 = vadd.f32 %v790, %v848
        %850 = vdwg.mxu0
        %851 = vmatpush.bf16.msra.mxu0 0
        %852 = vmatpush.bf16.msra.mxu0 0
        %853 = vmatpush.bf16.msra.mxu0 0
        %854 = vmatpush.bf16.msra.mxu0 0
        %855 = vmatpush.bf16.msra.mxu0 %v825
        %856 = vmatpush.bf16.msra.mxu0 %v823
        %857 = vmatpush.bf16.msra.mxu0 %v821
        %858 = vmatpush.bf16.msra.mxu0 %v819
        %859 = vmatmul.bf16.gmra.mxu0 %v835
        %v860 = vpop.f32.mrf.mxu0
        %v861 = vadd.f32 %v791, %v860
        %v862 = vpop.f32.mrf.mxu0
        %v863 = vadd.f32 %v791, %v862
        %864 = vdwg.mxu0
        %867 = vrot.lane.b32.xlu0 %v847, 112
        %v868 = vpop.permute.xlu0 %867
        %869 = vrot.lane.b32.xlu0 %v849, 112
        %v870 = vpop.permute.xlu0 %869
        %873 = vrot.lane.b32.xlu0 %v847, 96
        %v874 = vpop.permute.xlu0 %873
        %875 = vrot.lane.b32.xlu0 %v849, 96
        %v876 = vpop.permute.xlu0 %875
        %879 = vrot.lane.b32.xlu0 %v847, 80
        %v880 = vpop.permute.xlu0 %879
        %881 = vrot.lane.b32.xlu0 %v849, 80
        %v882 = vpop.permute.xlu0 %881
        %v885 = vrot.slane %v874, 4
        %vm886 = vcmask 1047556
        %v887 = vsel %vm886, %v885, %v847
        %v888 = vrot.slane %v847, 4
        %v889 = vsel %vm886, %v874, %v888
        %v891 = vunpack.c.l.s4 1983009808
        %v892 = vunpack.c.0.s8 %v891
        %v893 = vperm.slane %v887, %v892
        %v895 = vunpack.c.l.s4 1983009808
        %v896 = vunpack.c.0.s8 %v895
        %v897 = vperm.slane %v889, %v896
        %v898 = vrot.slane %v880, 4
        %v899 = vsel %vm886, %v898, %v868
        %v900 = vrot.slane %v868, 4
        %v901 = vsel %vm886, %v880, %v900
        %v903 = vunpack.c.l.s4 1983009808
        %v904 = vunpack.c.0.s8 %v903
        %v905 = vperm.slane %v899, %v904
        %v907 = vunpack.c.l.s4 1983009808
        %v908 = vunpack.c.0.s8 %v907
        %v909 = vperm.slane %v901, %v908
        %v910 = vrot.slane %v905, 4
        %v911 = vsel %vm886, %v910, %v893
        %v912 = vrot.slane %v893, 4
        %v913 = vsel %vm886, %v905, %v912
        %v915 = vunpack.c.l.s4 1934713408
        %v916 = vunpack.c.0.s8 %v915
        %v917 = vperm.slane %v911, %v916
        %v919 = vunpack.c.l.s4 1934713408
        %v920 = vunpack.c.0.s8 %v919
        %v921 = vperm.slane %v913, %v920
        %v922 = vrot.slane %v909, 4
        %v923 = vsel %vm886, %v922, %v897
        %v924 = vrot.slane %v897, 4
        %v925 = vsel %vm886, %v909, %v924
        %v927 = vunpack.c.l.s4 1934713408
        %v928 = vunpack.c.0.s8 %v927
        %v929 = vperm.slane %v923, %v928
        %v931 = vunpack.c.l.s4 1934713408
        %v932 = vunpack.c.0.s8 %v931
        %v933 = vperm.slane %v925, %v932
        %v934 = vrot.slane %v917, 4
        %v935 = vsel %vm886, 0.0, %v934
        %v936 = vrot.slane %v921, 4
        %v937 = vsel %vm886, 0.0, %v936
        %v938 = vrot.slane %v929, 4
        %v939 = vsel %vm886, 0.0, %v938
        %v940 = vrot.slane %v933, 4
        %v941 = vsel %vm886, 0.0, %v940
        %v942 = vrot.slane %v876, 4
        %v943 = vsel %vm886, %v942, %v849
        %v944 = vrot.slane %v849, 4
        %v945 = vsel %vm886, %v876, %v944
        %v947 = vunpack.c.l.s4 1983009808
        %v948 = vunpack.c.0.s8 %v947
        %v949 = vperm.slane %v943, %v948
        %v951 = vunpack.c.l.s4 1983009808
        %v952 = vunpack.c.0.s8 %v951
        %v953 = vperm.slane %v945, %v952
        %v954 = vrot.slane %v882, 4
        %v955 = vsel %vm886, %v954, %v870
        %v956 = vrot.slane %v870, 4
        %v957 = vsel %vm886, %v882, %v956
        %v959 = vunpack.c.l.s4 1983009808
        %v960 = vunpack.c.0.s8 %v959
        %v961 = vperm.slane %v955, %v960
        %v963 = vunpack.c.l.s4 1983009808
        %v964 = vunpack.c.0.s8 %v963
        %v965 = vperm.slane %v957, %v964
        %v966 = vrot.slane %v961, 4
        %v967 = vsel %vm886, %v966, %v949
        %v968 = vrot.slane %v949, 4
        %v969 = vsel %vm886, %v961, %v968
        %v971 = vunpack.c.l.s4 1934713408
        %v972 = vunpack.c.0.s8 %v971
        %v973 = vperm.slane %v967, %v972
        %v975 = vunpack.c.l.s4 1934713408
        %v976 = vunpack.c.0.s8 %v975
        %v977 = vperm.slane %v969, %v976
        %v978 = vrot.slane %v965, 4
        %v979 = vsel %vm886, %v978, %v953
        %v980 = vrot.slane %v953, 4
        %v981 = vsel %vm886, %v965, %v980
        %v983 = vunpack.c.l.s4 1934713408
        %v984 = vunpack.c.0.s8 %v983
        %v985 = vperm.slane %v979, %v984
        %v987 = vunpack.c.l.s4 1934713408
        %v988 = vunpack.c.0.s8 %v987
        %v989 = vperm.slane %v981, %v988
        %v990 = vrot.slane %v973, 4
        %v991 = vsel %vm886, 0.0, %v990
        %v992 = vrot.slane %v977, 4
        %v993 = vsel %vm886, 0.0, %v992
        %v994 = vrot.slane %v985, 4
        %v995 = vsel %vm886, 0.0, %v994
        %v996 = vrot.slane %v989, 4
        %v997 = vsel %vm886, 0.0, %v996
        %v998 = vsel %vm886, %v936, %v917
        %v1000 = vunpack.c.l.s4 1983009808
        %v1001 = vunpack.c.0.s8 %v1000
        %v1002 = vperm.slane %v998, %v1001
        %v1003 = vrot.slane %v937, 4
        %v1004 = vsel %vm886, %v1003, %v935
        %v1006 = vunpack.c.l.s4 1983009808
        %v1007 = vunpack.c.0.s8 %v1006
        %v1008 = vperm.slane %v1004, %v1007
        %v1009 = vsel %vm886, %v940, %v929
        %v1011 = vunpack.c.l.s4 1983009808
        %v1012 = vunpack.c.0.s8 %v1011
        %v1013 = vperm.slane %v1009, %v1012
        %v1014 = vrot.slane %v941, 4
        %v1015 = vsel %vm886, %v1014, %v939
        %v1017 = vunpack.c.l.s4 1983009808
        %v1018 = vunpack.c.0.s8 %v1017
        %v1019 = vperm.slane %v1015, %v1018
        %v1020 = vrot.slane %v1008, 4
        %v1021 = vsel %vm886, %v1020, %v1002
        %v1022 = vrot.slane %v1002, 4
        %v1023 = vsel %vm886, %v1008, %v1022
        %v1025 = vunpack.c.l.s4 1934713408
        %v1026 = vunpack.c.0.s8 %v1025
        %v1027 = vperm.slane %v1021, %v1026
        %v1029 = vunpack.c.l.s4 1934713408
        %v1030 = vunpack.c.0.s8 %v1029
        %v1031 = vperm.slane %v1023, %v1030
        %v1032 = vrot.slane %v1019, 4
        %v1033 = vsel %vm886, %v1032, %v1013
        %v1034 = vrot.slane %v1013, 4
        %v1035 = vsel %vm886, %v1019, %v1034
        %v1037 = vunpack.c.l.s4 1934713408
        %v1038 = vunpack.c.0.s8 %v1037
        %v1039 = vperm.slane %v1033, %v1038
        %v1041 = vunpack.c.l.s4 1934713408
        %v1042 = vunpack.c.0.s8 %v1041
        %v1043 = vperm.slane %v1035, %v1042
        %v1044 = vrot.slane %v1039, 4
        %v1045 = vsel %vm886, %v1044, %v1027
        %v1046 = vrot.slane %v1027, 4
        %v1047 = vsel %vm886, %v1039, %v1046
        %v1048 = vrot.slane %v1043, 4
        %v1049 = vsel %vm886, %v1048, %v1031
        %v1050 = vrot.slane %v1031, 4
        %v1051 = vsel %vm886, %v1043, %v1050
        %v1052 = vsel %vm886, %v992, %v973
        %v1054 = vunpack.c.l.s4 1983009808
        %v1055 = vunpack.c.0.s8 %v1054
        %v1056 = vperm.slane %v1052, %v1055
        %v1057 = vrot.slane %v993, 4
        %v1058 = vsel %vm886, %v1057, %v991
        %v1060 = vunpack.c.l.s4 1983009808
        %v1061 = vunpack.c.0.s8 %v1060
        %v1062 = vperm.slane %v1058, %v1061
        %v1063 = vsel %vm886, %v996, %v985
        %v1065 = vunpack.c.l.s4 1983009808
        %v1066 = vunpack.c.0.s8 %v1065
        %v1067 = vperm.slane %v1063, %v1066
        %v1068 = vrot.slane %v997, 4
        %v1069 = vsel %vm886, %v1068, %v995
        %v1071 = vunpack.c.l.s4 1983009808
        %v1072 = vunpack.c.0.s8 %v1071
        %v1073 = vperm.slane %v1069, %v1072
        %v1074 = vrot.slane %v1062, 4
        %v1075 = vsel %vm886, %v1074, %v1056
        %v1076 = vrot.slane %v1056, 4
        %v1077 = vsel %vm886, %v1062, %v1076
        %v1079 = vunpack.c.l.s4 1934713408
        %v1080 = vunpack.c.0.s8 %v1079
        %v1081 = vperm.slane %v1075, %v1080
        %v1083 = vunpack.c.l.s4 1934713408
        %v1084 = vunpack.c.0.s8 %v1083
        %v1085 = vperm.slane %v1077, %v1084
        %v1086 = vrot.slane %v1073, 4
        %v1087 = vsel %vm886, %v1086, %v1067
        %v1088 = vrot.slane %v1067, 4
        %v1089 = vsel %vm886, %v1073, %v1088
        %v1091 = vunpack.c.l.s4 1934713408
        %v1092 = vunpack.c.0.s8 %v1091
        %v1093 = vperm.slane %v1087, %v1092
        %v1095 = vunpack.c.l.s4 1934713408
        %v1096 = vunpack.c.0.s8 %v1095
        %v1097 = vperm.slane %v1089, %v1096
        %v1098 = vrot.slane %v1093, 4
        %v1099 = vsel %vm886, %v1098, %v1081
        %v1100 = vrot.slane %v1081, 4
        %v1101 = vsel %vm886, %v1093, %v1100
        %v1102 = vrot.slane %v1097, 4
        %v1103 = vsel %vm886, %v1102, %v1085
        %v1104 = vrot.slane %v1085, 4
        %v1105 = vsel %vm886, %v1097, %v1104
        %1106 = vrot.lane.b32.xlu0 %v847, 64
        %v1107 = vpop.permute.xlu0 %1106
        %1108 = vrot.lane.b32.xlu0 %v849, 64
        %v1109 = vpop.permute.xlu0 %1108
        %1110 = vrot.lane.b32.xlu0 %v868, 64
        %v1111 = vpop.permute.xlu0 %1110
        %1112 = vrot.lane.b32.xlu0 %v870, 64
        %v1113 = vpop.permute.xlu0 %1112
        %1114 = vrot.lane.b32.xlu0 %v874, 64
        %v1115 = vpop.permute.xlu0 %1114
        %1116 = vrot.lane.b32.xlu0 %v876, 64
        %v1117 = vpop.permute.xlu0 %1116
        %1118 = vrot.lane.b32.xlu0 %v880, 64
        %v1119 = vpop.permute.xlu0 %1118
        %1120 = vrot.lane.b32.xlu0 %v882, 64
        %v1121 = vpop.permute.xlu0 %1120
        %v1130 = vrot.slane %v1115, 4
        %v1131 = vsel %vm886, %v1130, %v1107
        %v1132 = vrot.slane %v1107, 4
        %v1133 = vsel %vm886, %v1115, %v1132
        %v1135 = vunpack.c.l.s4 1983009808
        %v1136 = vunpack.c.0.s8 %v1135
        %v1137 = vperm.slane %v1131, %v1136
        %v1139 = vunpack.c.l.s4 1983009808
        %v1140 = vunpack.c.0.s8 %v1139
        %v1141 = vperm.slane %v1133, %v1140
        %v1142 = vrot.slane %v1119, 4
        %v1143 = vsel %vm886, %v1142, %v1111
        %v1144 = vrot.slane %v1111, 4
        %v1145 = vsel %vm886, %v1119, %v1144
        %v1147 = vunpack.c.l.s4 1983009808
        %v1148 = vunpack.c.0.s8 %v1147
        %v1149 = vperm.slane %v1143, %v1148
        %v1151 = vunpack.c.l.s4 1983009808
        %v1152 = vunpack.c.0.s8 %v1151
        %v1153 = vperm.slane %v1145, %v1152
        %v1154 = vrot.slane %v1149, 4
        %v1155 = vsel %vm886, %v1154, %v1137
        %v1156 = vrot.slane %v1137, 4
        %v1157 = vsel %vm886, %v1149, %v1156
        %v1159 = vunpack.c.l.s4 1934713408
        %v1160 = vunpack.c.0.s8 %v1159
        %v1161 = vperm.slane %v1155, %v1160
        %v1163 = vunpack.c.l.s4 1934713408
        %v1164 = vunpack.c.0.s8 %v1163
        %v1165 = vperm.slane %v1157, %v1164
        %v1166 = vrot.slane %v1153, 4
        %v1167 = vsel %vm886, %v1166, %v1141
        %v1168 = vrot.slane %v1141, 4
        %v1169 = vsel %vm886, %v1153, %v1168
        %v1171 = vunpack.c.l.s4 1934713408
        %v1172 = vunpack.c.0.s8 %v1171
        %v1173 = vperm.slane %v1167, %v1172
        %v1175 = vunpack.c.l.s4 1934713408
        %v1176 = vunpack.c.0.s8 %v1175
        %v1177 = vperm.slane %v1169, %v1176
        %v1178 = vrot.slane %v1161, 4
        %v1179 = vsel %vm886, 0.0, %v1178
        %v1180 = vrot.slane %v1165, 4
        %v1181 = vsel %vm886, 0.0, %v1180
        %v1182 = vrot.slane %v1173, 4
        %v1183 = vsel %vm886, 0.0, %v1182
        %v1184 = vrot.slane %v1177, 4
        %v1185 = vsel %vm886, 0.0, %v1184
        %v1186 = vrot.slane %v1117, 4
        %v1187 = vsel %vm886, %v1186, %v1109
        %v1188 = vrot.slane %v1109, 4
        %v1189 = vsel %vm886, %v1117, %v1188
        %v1191 = vunpack.c.l.s4 1983009808
        %v1192 = vunpack.c.0.s8 %v1191
        %v1193 = vperm.slane %v1187, %v1192
        %v1195 = vunpack.c.l.s4 1983009808
        %v1196 = vunpack.c.0.s8 %v1195
        %v1197 = vperm.slane %v1189, %v1196
        %v1198 = vrot.slane %v1121, 4
        %v1199 = vsel %vm886, %v1198, %v1113
        %v1200 = vrot.slane %v1113, 4
        %v1201 = vsel %vm886, %v1121, %v1200
        %v1203 = vunpack.c.l.s4 1983009808
        %v1204 = vunpack.c.0.s8 %v1203
        %v1205 = vperm.slane %v1199, %v1204
        %v1207 = vunpack.c.l.s4 1983009808
        %v1208 = vunpack.c.0.s8 %v1207
        %v1209 = vperm.slane %v1201, %v1208
        %v1210 = vrot.slane %v1205, 4
        %v1211 = vsel %vm886, %v1210, %v1193
        %v1212 = vrot.slane %v1193, 4
        %v1213 = vsel %vm886, %v1205, %v1212
        %v1215 = vunpack.c.l.s4 1934713408
        %v1216 = vunpack.c.0.s8 %v1215
        %v1217 = vperm.slane %v1211, %v1216
        %v1219 = vunpack.c.l.s4 1934713408
        %v1220 = vunpack.c.0.s8 %v1219
        %v1221 = vperm.slane %v1213, %v1220
        %v1222 = vrot.slane %v1209, 4
        %v1223 = vsel %vm886, %v1222, %v1197
        %v1224 = vrot.slane %v1197, 4
        %v1225 = vsel %vm886, %v1209, %v1224
        %v1227 = vunpack.c.l.s4 1934713408
        %v1228 = vunpack.c.0.s8 %v1227
        %v1229 = vperm.slane %v1223, %v1228
        %v1231 = vunpack.c.l.s4 1934713408
        %v1232 = vunpack.c.0.s8 %v1231
        %v1233 = vperm.slane %v1225, %v1232
        %v1234 = vrot.slane %v1217, 4
        %v1235 = vsel %vm886, 0.0, %v1234
        %v1236 = vrot.slane %v1221, 4
        %v1237 = vsel %vm886, 0.0, %v1236
        %v1238 = vrot.slane %v1229, 4
        %v1239 = vsel %vm886, 0.0, %v1238
        %v1240 = vrot.slane %v1233, 4
        %v1241 = vsel %vm886, 0.0, %v1240
        %v1242 = vsel %vm886, %v1180, %v1161
        %v1244 = vunpack.c.l.s4 1983009808
        %v1245 = vunpack.c.0.s8 %v1244
        %v1246 = vperm.slane %v1242, %v1245
        %v1247 = vrot.slane %v1181, 4
        %v1248 = vsel %vm886, %v1247, %v1179
        %v1250 = vunpack.c.l.s4 1983009808
        %v1251 = vunpack.c.0.s8 %v1250
        %v1252 = vperm.slane %v1248, %v1251
        %v1253 = vsel %vm886, %v1184, %v1173
        %v1255 = vunpack.c.l.s4 1983009808
        %v1256 = vunpack.c.0.s8 %v1255
        %v1257 = vperm.slane %v1253, %v1256
        %v1258 = vrot.slane %v1185, 4
        %v1259 = vsel %vm886, %v1258, %v1183
        %v1261 = vunpack.c.l.s4 1983009808
        %v1262 = vunpack.c.0.s8 %v1261
        %v1263 = vperm.slane %v1259, %v1262
        %v1264 = vrot.slane %v1252, 4
        %v1265 = vsel %vm886, %v1264, %v1246
        %v1266 = vrot.slane %v1246, 4
        %v1267 = vsel %vm886, %v1252, %v1266
        %v1269 = vunpack.c.l.s4 1934713408
        %v1270 = vunpack.c.0.s8 %v1269
        %v1271 = vperm.slane %v1265, %v1270
        %v1273 = vunpack.c.l.s4 1934713408
        %v1274 = vunpack.c.0.s8 %v1273
        %v1275 = vperm.slane %v1267, %v1274
        %v1276 = vrot.slane %v1263, 4
        %v1277 = vsel %vm886, %v1276, %v1257
        %v1278 = vrot.slane %v1257, 4
        %v1279 = vsel %vm886, %v1263, %v1278
        %v1281 = vunpack.c.l.s4 1934713408
        %v1282 = vunpack.c.0.s8 %v1281
        %v1283 = vperm.slane %v1277, %v1282
        %v1285 = vunpack.c.l.s4 1934713408
        %v1286 = vunpack.c.0.s8 %v1285
        %v1287 = vperm.slane %v1279, %v1286
        %v1288 = vrot.slane %v1283, 4
        %v1289 = vsel %vm886, %v1288, %v1271
        %v1290 = vrot.slane %v1271, 4
        %v1291 = vsel %vm886, %v1283, %v1290
        %v1292 = vrot.slane %v1287, 4
        %v1293 = vsel %vm886, %v1292, %v1275
        %v1294 = vrot.slane %v1275, 4
        %v1295 = vsel %vm886, %v1287, %v1294
        %v1296 = vsel %vm886, %v1236, %v1217
        %v1298 = vunpack.c.l.s4 1983009808
        %v1299 = vunpack.c.0.s8 %v1298
        %v1300 = vperm.slane %v1296, %v1299
        %v1301 = vrot.slane %v1237, 4
        %v1302 = vsel %vm886, %v1301, %v1235
        %v1304 = vunpack.c.l.s4 1983009808
        %v1305 = vunpack.c.0.s8 %v1304
        %v1306 = vperm.slane %v1302, %v1305
        %v1307 = vsel %vm886, %v1240, %v1229
        %v1309 = vunpack.c.l.s4 1983009808
        %v1310 = vunpack.c.0.s8 %v1309
        %v1311 = vperm.slane %v1307, %v1310
        %v1312 = vrot.slane %v1241, 4
        %v1313 = vsel %vm886, %v1312, %v1239
        %v1315 = vunpack.c.l.s4 1983009808
        %v1316 = vunpack.c.0.s8 %v1315
        %v1317 = vperm.slane %v1313, %v1316
        %v1318 = vrot.slane %v1306, 4
        %v1319 = vsel %vm886, %v1318, %v1300
        %v1320 = vrot.slane %v1300, 4
        %v1321 = vsel %vm886, %v1306, %v1320
        %v1323 = vunpack.c.l.s4 1934713408
        %v1324 = vunpack.c.0.s8 %v1323
        %v1325 = vperm.slane %v1319, %v1324
        %v1327 = vunpack.c.l.s4 1934713408
        %v1328 = vunpack.c.0.s8 %v1327
        %v1329 = vperm.slane %v1321, %v1328
        %v1330 = vrot.slane %v1317, 4
        %v1331 = vsel %vm886, %v1330, %v1311
        %v1332 = vrot.slane %v1311, 4
        %v1333 = vsel %vm886, %v1317, %v1332
        %v1335 = vunpack.c.l.s4 1934713408
        %v1336 = vunpack.c.0.s8 %v1335
        %v1337 = vperm.slane %v1331, %v1336
        %v1339 = vunpack.c.l.s4 1934713408
        %v1340 = vunpack.c.0.s8 %v1339
        %v1341 = vperm.slane %v1333, %v1340
        %v1342 = vrot.slane %v1337, 4
        %v1343 = vsel %vm886, %v1342, %v1325
        %v1344 = vrot.slane %v1325, 4
        %v1345 = vsel %vm886, %v1337, %v1344
        %v1346 = vrot.slane %v1341, 4
        %v1347 = vsel %vm886, %v1346, %v1329
        %v1348 = vrot.slane %v1329, 4
        %v1349 = vsel %vm886, %v1341, %v1348
        %1352 = vrot.lane.b32.xlu0 %v861, 112
        %v1353 = vpop.permute.xlu0 %1352
        %1354 = vrot.lane.b32.xlu0 %v863, 112
        %v1355 = vpop.permute.xlu0 %1354
        %1358 = vrot.lane.b32.xlu0 %v861, 96
        %v1359 = vpop.permute.xlu0 %1358
        %1360 = vrot.lane.b32.xlu0 %v863, 96
        %v1361 = vpop.permute.xlu0 %1360
        %1364 = vrot.lane.b32.xlu0 %v861, 80
        %v1365 = vpop.permute.xlu0 %1364
        %1366 = vrot.lane.b32.xlu0 %v863, 80
        %v1367 = vpop.permute.xlu0 %1366
        %v1370 = vrot.slane %v1359, 4
        %v1371 = vsel %vm886, %v1370, %v861
        %v1372 = vrot.slane %v861, 4
        %v1373 = vsel %vm886, %v1359, %v1372
        %v1375 = vunpack.c.l.s4 1983009808
        %v1376 = vunpack.c.0.s8 %v1375
        %v1377 = vperm.slane %v1371, %v1376
        %v1379 = vunpack.c.l.s4 1983009808
        %v1380 = vunpack.c.0.s8 %v1379
        %v1381 = vperm.slane %v1373, %v1380
        %v1382 = vrot.slane %v1365, 4
        %v1383 = vsel %vm886, %v1382, %v1353
        %v1384 = vrot.slane %v1353, 4
        %v1385 = vsel %vm886, %v1365, %v1384
        %v1387 = vunpack.c.l.s4 1983009808
        %v1388 = vunpack.c.0.s8 %v1387
        %v1389 = vperm.slane %v1383, %v1388
        %v1391 = vunpack.c.l.s4 1983009808
        %v1392 = vunpack.c.0.s8 %v1391
        %v1393 = vperm.slane %v1385, %v1392
        %v1394 = vrot.slane %v1389, 4
        %v1395 = vsel %vm886, %v1394, %v1377
        %v1396 = vrot.slane %v1377, 4
        %v1397 = vsel %vm886, %v1389, %v1396
        %v1399 = vunpack.c.l.s4 1934713408
        %v1400 = vunpack.c.0.s8 %v1399
        %v1401 = vperm.slane %v1395, %v1400
        %v1403 = vunpack.c.l.s4 1934713408
        %v1404 = vunpack.c.0.s8 %v1403
        %v1405 = vperm.slane %v1397, %v1404
        %v1406 = vrot.slane %v1393, 4
        %v1407 = vsel %vm886, %v1406, %v1381
        %v1408 = vrot.slane %v1381, 4
        %v1409 = vsel %vm886, %v1393, %v1408
        %v1411 = vunpack.c.l.s4 1934713408
        %v1412 = vunpack.c.0.s8 %v1411
        %v1413 = vperm.slane %v1407, %v1412
        %v1415 = vunpack.c.l.s4 1934713408
        %v1416 = vunpack.c.0.s8 %v1415
        %v1417 = vperm.slane %v1409, %v1416
        %v1418 = vrot.slane %v1401, 4
        %v1419 = vsel %vm886, 0.0, %v1418
        %v1420 = vrot.slane %v1405, 4
        %v1421 = vsel %vm886, 0.0, %v1420
        %v1422 = vrot.slane %v1413, 4
        %v1423 = vsel %vm886, 0.0, %v1422
        %v1424 = vrot.slane %v1417, 4
        %v1425 = vsel %vm886, 0.0, %v1424
        %v1426 = vrot.slane %v1361, 4
        %v1427 = vsel %vm886, %v1426, %v863
        %v1428 = vrot.slane %v863, 4
        %v1429 = vsel %vm886, %v1361, %v1428
        %v1431 = vunpack.c.l.s4 1983009808
        %v1432 = vunpack.c.0.s8 %v1431
        %v1433 = vperm.slane %v1427, %v1432
        %v1435 = vunpack.c.l.s4 1983009808
        %v1436 = vunpack.c.0.s8 %v1435
        %v1437 = vperm.slane %v1429, %v1436
        %v1438 = vrot.slane %v1367, 4
        %v1439 = vsel %vm886, %v1438, %v1355
        %v1440 = vrot.slane %v1355, 4
        %v1441 = vsel %vm886, %v1367, %v1440
        %v1443 = vunpack.c.l.s4 1983009808
        %v1444 = vunpack.c.0.s8 %v1443
        %v1445 = vperm.slane %v1439, %v1444
        %v1447 = vunpack.c.l.s4 1983009808
        %v1448 = vunpack.c.0.s8 %v1447
        %v1449 = vperm.slane %v1441, %v1448
        %v1450 = vrot.slane %v1445, 4
        %v1451 = vsel %vm886, %v1450, %v1433
        %v1452 = vrot.slane %v1433, 4
        %v1453 = vsel %vm886, %v1445, %v1452
        %v1455 = vunpack.c.l.s4 1934713408
        %v1456 = vunpack.c.0.s8 %v1455
        %v1457 = vperm.slane %v1451, %v1456
        %v1459 = vunpack.c.l.s4 1934713408
        %v1460 = vunpack.c.0.s8 %v1459
        %v1461 = vperm.slane %v1453, %v1460
        %v1462 = vrot.slane %v1449, 4
        %v1463 = vsel %vm886, %v1462, %v1437
        %v1464 = vrot.slane %v1437, 4
        %v1465 = vsel %vm886, %v1449, %v1464
        %v1467 = vunpack.c.l.s4 1934713408
        %v1468 = vunpack.c.0.s8 %v1467
        %v1469 = vperm.slane %v1463, %v1468
        %v1471 = vunpack.c.l.s4 1934713408
        %v1472 = vunpack.c.0.s8 %v1471
        %v1473 = vperm.slane %v1465, %v1472
        %v1474 = vrot.slane %v1457, 4
        %v1475 = vsel %vm886, 0.0, %v1474
        %v1476 = vrot.slane %v1461, 4
        %v1477 = vsel %vm886, 0.0, %v1476
        %v1478 = vrot.slane %v1469, 4
        %v1479 = vsel %vm886, 0.0, %v1478
        %v1480 = vrot.slane %v1473, 4
        %v1481 = vsel %vm886, 0.0, %v1480
        %v1482 = vsel %vm886, %v1420, %v1401
        %v1484 = vunpack.c.l.s4 1983009808
        %v1485 = vunpack.c.0.s8 %v1484
        %v1486 = vperm.slane %v1482, %v1485
        %v1487 = vrot.slane %v1421, 4
        %v1488 = vsel %vm886, %v1487, %v1419
        %v1490 = vunpack.c.l.s4 1983009808
        %v1491 = vunpack.c.0.s8 %v1490
        %v1492 = vperm.slane %v1488, %v1491
        %v1493 = vsel %vm886, %v1424, %v1413
        %v1495 = vunpack.c.l.s4 1983009808
        %v1496 = vunpack.c.0.s8 %v1495
        %v1497 = vperm.slane %v1493, %v1496
        %v1498 = vrot.slane %v1425, 4
        %v1499 = vsel %vm886, %v1498, %v1423
        %v1501 = vunpack.c.l.s4 1983009808
        %v1502 = vunpack.c.0.s8 %v1501
        %v1503 = vperm.slane %v1499, %v1502
        %v1504 = vrot.slane %v1492, 4
        %v1505 = vsel %vm886, %v1504, %v1486
        %v1506 = vrot.slane %v1486, 4
        %v1507 = vsel %vm886, %v1492, %v1506
        %v1509 = vunpack.c.l.s4 1934713408
        %v1510 = vunpack.c.0.s8 %v1509
        %v1511 = vperm.slane %v1505, %v1510
        %v1513 = vunpack.c.l.s4 1934713408
        %v1514 = vunpack.c.0.s8 %v1513
        %v1515 = vperm.slane %v1507, %v1514
        %v1516 = vrot.slane %v1503, 4
        %v1517 = vsel %vm886, %v1516, %v1497
        %v1518 = vrot.slane %v1497, 4
        %v1519 = vsel %vm886, %v1503, %v1518
        %v1521 = vunpack.c.l.s4 1934713408
        %v1522 = vunpack.c.0.s8 %v1521
        %v1523 = vperm.slane %v1517, %v1522
        %v1525 = vunpack.c.l.s4 1934713408
        %v1526 = vunpack.c.0.s8 %v1525
        %v1527 = vperm.slane %v1519, %v1526
        %v1528 = vrot.slane %v1523, 4
        %v1529 = vsel %vm886, %v1528, %v1511
        %v1530 = vrot.slane %v1511, 4
        %v1531 = vsel %vm886, %v1523, %v1530
        %v1532 = vrot.slane %v1527, 4
        %v1533 = vsel %vm886, %v1532, %v1515
        %v1534 = vrot.slane %v1515, 4
        %v1535 = vsel %vm886, %v1527, %v1534
        %v1536 = vsel %vm886, %v1476, %v1457
        %v1538 = vunpack.c.l.s4 1983009808
        %v1539 = vunpack.c.0.s8 %v1538
        %v1540 = vperm.slane %v1536, %v1539
        %v1541 = vrot.slane %v1477, 4
        %v1542 = vsel %vm886, %v1541, %v1475
        %v1544 = vunpack.c.l.s4 1983009808
        %v1545 = vunpack.c.0.s8 %v1544
        %v1546 = vperm.slane %v1542, %v1545
        %v1547 = vsel %vm886, %v1480, %v1469
        %v1549 = vunpack.c.l.s4 1983009808
        %v1550 = vunpack.c.0.s8 %v1549
        %v1551 = vperm.slane %v1547, %v1550
        %v1552 = vrot.slane %v1481, 4
        %v1553 = vsel %vm886, %v1552, %v1479
        %v1555 = vunpack.c.l.s4 1983009808
        %v1556 = vunpack.c.0.s8 %v1555
        %v1557 = vperm.slane %v1553, %v1556
        %v1558 = vrot.slane %v1546, 4
        %v1559 = vsel %vm886, %v1558, %v1540
        %v1560 = vrot.slane %v1540, 4
        %v1561 = vsel %vm886, %v1546, %v1560
        %v1563 = vunpack.c.l.s4 1934713408
        %v1564 = vunpack.c.0.s8 %v1563
        %v1565 = vperm.slane %v1559, %v1564
        %v1567 = vunpack.c.l.s4 1934713408
        %v1568 = vunpack.c.0.s8 %v1567
        %v1569 = vperm.slane %v1561, %v1568
        %v1570 = vrot.slane %v1557, 4
        %v1571 = vsel %vm886, %v1570, %v1551
        %v1572 = vrot.slane %v1551, 4
        %v1573 = vsel %vm886, %v1557, %v1572
        %v1575 = vunpack.c.l.s4 1934713408
        %v1576 = vunpack.c.0.s8 %v1575
        %v1577 = vperm.slane %v1571, %v1576
        %v1579 = vunpack.c.l.s4 1934713408
        %v1580 = vunpack.c.0.s8 %v1579
        %v1581 = vperm.slane %v1573, %v1580
        %v1582 = vrot.slane %v1577, 4
        %v1583 = vsel %vm886, %v1582, %v1565
        %v1584 = vrot.slane %v1565, 4
        %v1585 = vsel %vm886, %v1577, %v1584
        %v1586 = vrot.slane %v1581, 4
        %v1587 = vsel %vm886, %v1586, %v1569
        %v1588 = vrot.slane %v1569, 4
        %v1589 = vsel %vm886, %v1581, %v1588
        %v1590 = vlaneseq
        %v1591 = vshrl.u32 %v1590, 7
        %v1592 = vadd.s32 %v1591, 8
        %v1593 = vlaneseq
        %v1594 = vand.u32 %v1593, 127
        %vm1595 = vcmp.ge.s32.totalorder %v1591, %v1594
        %vm1596 = vcmp.ge.s32.totalorder %v1592, %v1594
        %v1597 = vsel %vm1595, 0.0, -1e+30
        %v1598 = vsel %vm1596, 0.0, -1e+30
        %v1599 = vpack.c.bf16 %v1045, %v1045
        %v1600 = vpack.c.bf16 %v1099, %v1099
        %v1601 = vpack.c.bf16 %v1047, %v1047
        %v1602 = vpack.c.bf16 %v1101, %v1101
        %v1603 = vpack.c.bf16 %v1049, %v1049
        %v1604 = vpack.c.bf16 %v1103, %v1103
        %v1605 = vpack.c.bf16 %v1051, %v1051
        %v1606 = vpack.c.bf16 %v1105, %v1105
        %v1607 = vpack.c.bf16 %v1289, %v1289
        %v1608 = vpack.c.bf16 %v1343, %v1343
        %v1609 = vpack.c.bf16 %v1291, %v1291
        %v1610 = vpack.c.bf16 %v1345, %v1345
        %v1611 = vpack.c.bf16 %v1293, %v1293
        %v1612 = vpack.c.bf16 %v1347, %v1347
        %v1613 = vpack.c.bf16 %v1295, %v1295
        %v1614 = vpack.c.bf16 %v1349, %v1349
        %v1617 = vunpack.c.l.b16 %v1599
        %v1618 = vunpack.c.l.b16 %v1600
        %v1619 = vpack.c.b16 %v1618, %v1617
        %v1622 = vunpack.c.l.b16 %v1607
        %v1623 = vunpack.c.l.b16 %v1608
        %v1624 = vpack.c.b16 %v1623, %v1622
        %vm1625 = vcmask 130048
        %v1627 = vsel %vm1625, %v1619, 0
        %v1630 = vsel %vm1625, %v1624, 0
        %1632 = vmatpush.bf16.xpose.msra.mxu0 0
        %1633 = vmatpush.bf16.xpose.msra.mxu0 0
        %1634 = vmatpush.bf16.xpose.msra.mxu0 0
        %1635 = vmatpush.bf16.xpose.msra.mxu0 0
        %1636 = vmatpush.bf16.xpose.msra.mxu0 0
        %1637 = vmatpush.bf16.xpose.msra.mxu0 0
        %1638 = vmatpush.bf16.xpose.msra.mxu0 0
        %1639 = vmatpush.bf16.xpose.msra.mxu0 %v1630
        %1640 = vmatmul.bf16.gmra.mxu0 %v1627
        %v1641 = vpop.f32.mrf.mxu0
        %v1642 = vadd.f32 %v1597, %v1641
        %v1643 = vpop.f32.mrf.mxu0
        %v1644 = vadd.f32 %v1598, %v1643
        %1645 = vdwg.mxu0
        %v1648 = vunpack.c.l.b16 %v1601
        %v1649 = vunpack.c.l.b16 %v1602
        %v1650 = vpack.c.b16 %v1649, %v1648
        %v1653 = vunpack.c.l.b16 %v1609
        %v1654 = vunpack.c.l.b16 %v1610
        %v1655 = vpack.c.b16 %v1654, %v1653
        %v1657 = vsel %vm1625, %v1650, 0
        %v1660 = vsel %vm1625, %v1655, 0
        %1662 = vmatpush.bf16.xpose.msra.mxu0 0
        %1663 = vmatpush.bf16.xpose.msra.mxu0 0
        %1664 = vmatpush.bf16.xpose.msra.mxu0 0
        %1665 = vmatpush.bf16.xpose.msra.mxu0 0
        %1666 = vmatpush.bf16.xpose.msra.mxu0 0
        %1667 = vmatpush.bf16.xpose.msra.mxu0 0
        %1668 = vmatpush.bf16.xpose.msra.mxu0 0
        %1669 = vmatpush.bf16.xpose.msra.mxu0 %v1660
        %1670 = vmatmul.bf16.gmra.mxu0 %v1657
        %v1671 = vpop.f32.mrf.mxu0
        %v1672 = vadd.f32 %v1597, %v1671
        %v1673 = vpop.f32.mrf.mxu0
        %v1674 = vadd.f32 %v1598, %v1673
        %1675 = vdwg.mxu0
        %v1678 = vunpack.c.l.b16 %v1603
        %v1679 = vunpack.c.l.b16 %v1604
        %v1680 = vpack.c.b16 %v1679, %v1678
        %v1683 = vunpack.c.l.b16 %v1611
        %v1684 = vunpack.c.l.b16 %v1612
        %v1685 = vpack.c.b16 %v1684, %v1683
        %v1687 = vsel %vm1625, %v1680, 0
        %v1690 = vsel %vm1625, %v1685, 0
        %1692 = vmatpush.bf16.xpose.msra.mxu0 0
        %1693 = vmatpush.bf16.xpose.msra.mxu0 0
        %1694 = vmatpush.bf16.xpose.msra.mxu0 0
        %1695 = vmatpush.bf16.xpose.msra.mxu0 0
        %1696 = vmatpush.bf16.xpose.msra.mxu0 0
        %1697 = vmatpush.bf16.xpose.msra.mxu0 0
        %1698 = vmatpush.bf16.xpose.msra.mxu0 0
        %1699 = vmatpush.bf16.xpose.msra.mxu0 %v1690
        %1700 = vmatmul.bf16.gmra.mxu0 %v1687
        %v1701 = vpop.f32.mrf.mxu0
        %v1702 = vadd.f32 %v1597, %v1701
        %v1703 = vpop.f32.mrf.mxu0
        %v1704 = vadd.f32 %v1598, %v1703
        %1705 = vdwg.mxu0
        %v1708 = vunpack.c.l.b16 %v1605
        %v1709 = vunpack.c.l.b16 %v1606
        %v1710 = vpack.c.b16 %v1709, %v1708
        %v1713 = vunpack.c.l.b16 %v1613
        %v1714 = vunpack.c.l.b16 %v1614
        %v1715 = vpack.c.b16 %v1714, %v1713
        %v1717 = vsel %vm1625, %v1710, 0
        %v1720 = vsel %vm1625, %v1715, 0
        %1722 = vmatpush.bf16.xpose.msra.mxu0 0
        %1723 = vmatpush.bf16.xpose.msra.mxu0 0
        %1724 = vmatpush.bf16.xpose.msra.mxu0 0
        %1725 = vmatpush.bf16.xpose.msra.mxu0 0
        %1726 = vmatpush.bf16.xpose.msra.mxu0 0
        %1727 = vmatpush.bf16.xpose.msra.mxu0 0
        %1728 = vmatpush.bf16.xpose.msra.mxu0 0
        %1729 = vmatpush.bf16.xpose.msra.mxu0 %v1720
        %1730 = vmatmul.bf16.gmra.mxu0 %v1717
        %v1731 = vpop.f32.mrf.mxu0
        %v1732 = vadd.f32 %v1597, %v1731
        %v1733 = vpop.f32.mrf.mxu0
        %v1734 = vadd.f32 %v1598, %v1733
        %1735 = vdwg.mxu0
        %v1736 = vsel %vm1625, %v1642, -inf
        %1737 = vmax.xlane.f32.xlu0 %v1736
        %v1738 = vpop.xlane.xlu0 %1737
        %v1739 = vsel %vm1625, %v1644, -inf
        %1740 = vmax.xlane.f32.xlu0 %v1739
        %v1741 = vpop.xlane.xlu0 %1740
        %v1742 = vsel %vm1625, %v1672, -inf
        %1743 = vmax.xlane.f32.xlu0 %v1742
        %v1744 = vpop.xlane.xlu0 %1743
        %v1745 = vsel %vm1625, %v1674, -inf
        %1746 = vmax.xlane.f32.xlu0 %v1745
        %v1747 = vpop.xlane.xlu0 %1746
        %v1748 = vsel %vm1625, %v1702, -inf
        %1749 = vmax.xlane.f32.xlu0 %v1748
        %v1750 = vpop.xlane.xlu0 %1749
        %v1751 = vsel %vm1625, %v1704, -inf
        %1752 = vmax.xlane.f32.xlu0 %v1751
        %v1753 = vpop.xlane.xlu0 %1752
        %v1754 = vsel %vm1625, %v1732, -inf
        %1755 = vmax.xlane.f32.xlu0 %v1754
        %v1756 = vpop.xlane.xlu0 %1755
        %v1757 = vsel %vm1625, %v1734, -inf
        %1758 = vmax.xlane.f32.xlu0 %v1757
        %v1759 = vpop.xlane.xlu0 %1758
        %v1760 = vsub.f32 %v1642, %v1738
        %v1761 = vsub.f32 %v1644, %v1741
        %v1762 = vsub.f32 %v1672, %v1744
        %v1763 = vsub.f32 %v1674, %v1747
        %v1764 = vsub.f32 %v1702, %v1750
        %v1765 = vsub.f32 %v1704, %v1753
        %v1766 = vsub.f32 %v1732, %v1756
        %v1767 = vsub.f32 %v1734, %v1759
        %v1768 = vmul.f32 %v1760, 1.442695
        %v1769 = vpow.pop %v1768
        %v1770 = vmul.f32 %v1761, 1.442695
        %v1771 = vpow.pop %v1770
        %v1772 = vmul.f32 %v1762, 1.442695
        %v1773 = vpow.pop %v1772
        %v1774 = vmul.f32 %v1763, 1.442695
        %v1775 = vpow.pop %v1774
        %v1776 = vmul.f32 %v1764, 1.442695
        %v1777 = vpow.pop %v1776
        %v1778 = vmul.f32 %v1765, 1.442695
        %v1779 = vpow.pop %v1778
        %v1780 = vmul.f32 %v1766, 1.442695
        %v1781 = vpow.pop %v1780
        %v1782 = vmul.f32 %v1767, 1.442695
        %v1783 = vpow.pop %v1782
        %v1784 = vsel %vm1625, %v1769, 0.0
        %1785 = vadd.xlane.f32.xlu0 %v1784
        %v1786 = vpop.xlane.xlu0 %1785
        %v1787 = vsel %vm1625, %v1771, 0.0
        %1788 = vadd.xlane.f32.xlu0 %v1787
        %v1789 = vpop.xlane.xlu0 %1788
        %v1790 = vsel %vm1625, %v1773, 0.0
        %1791 = vadd.xlane.f32.xlu0 %v1790
        %v1792 = vpop.xlane.xlu0 %1791
        %v1793 = vsel %vm1625, %v1775, 0.0
        %1794 = vadd.xlane.f32.xlu0 %v1793
        %v1795 = vpop.xlane.xlu0 %1794
        %v1796 = vsel %vm1625, %v1777, 0.0
        %1797 = vadd.xlane.f32.xlu0 %v1796
        %v1798 = vpop.xlane.xlu0 %1797
        %v1799 = vsel %vm1625, %v1779, 0.0
        %1800 = vadd.xlane.f32.xlu0 %v1799
        %v1801 = vpop.xlane.xlu0 %1800
        %v1802 = vsel %vm1625, %v1781, 0.0
        %1803 = vadd.xlane.f32.xlu0 %v1802
        %v1804 = vpop.xlane.xlu0 %1803
        %v1805 = vsel %vm1625, %v1783, 0.0
        %1806 = vadd.xlane.f32.xlu0 %v1805
        %v1807 = vpop.xlane.xlu0 %1806
        %v1808 = vrcp.pop %v1786
        %v1809 = vrcp.pop %v1789
        %v1810 = vrcp.pop %v1792
        %v1811 = vrcp.pop %v1795
        %v1812 = vrcp.pop %v1798
        %v1813 = vrcp.pop %v1801
        %v1814 = vrcp.pop %v1804
        %v1815 = vrcp.pop %v1807
        %v1816 = vmul.f32 %v1769, %v1808
        %v1817 = vmul.f32 %v1771, %v1809
        %v1818 = vmul.f32 %v1773, %v1810
        %v1819 = vmul.f32 %v1775, %v1811
        %v1820 = vmul.f32 %v1777, %v1812
        %v1821 = vmul.f32 %v1779, %v1813
        %v1822 = vmul.f32 %v1781, %v1814
        %v1823 = vmul.f32 %v1783, %v1815
        %v1824 = vpack.c.bf16 %v1816, %v1816
        %v1825 = vpack.c.bf16 %v1817, %v1817
        %v1826 = vpack.c.bf16 %v1818, %v1818
        %v1827 = vpack.c.bf16 %v1819, %v1819
        %v1828 = vpack.c.bf16 %v1820, %v1820
        %v1829 = vpack.c.bf16 %v1821, %v1821
        %v1830 = vpack.c.bf16 %v1822, %v1822
        %v1831 = vpack.c.bf16 %v1823, %v1823
        %v1832 = vpack.c.bf16 %v1529, %v1529
        %v1833 = vpack.c.bf16 %v1583, %v1583
        %v1834 = vpack.c.bf16 %v1531, %v1531
        %v1835 = vpack.c.bf16 %v1585, %v1585
        %v1836 = vpack.c.bf16 %v1533, %v1533
        %v1837 = vpack.c.bf16 %v1587, %v1587
        %v1838 = vpack.c.bf16 %v1535, %v1535
        %v1839 = vpack.c.bf16 %v1589, %v1589
        %v1842 = vunpack.c.l.b16 %v1824
        %v1843 = vunpack.c.l.b16 %v1825
        %v1844 = vpack.c.b16 %v1843, %v1842
        %v1847 = vunpack.c.l.b16 %v1832
        %v1848 = vunpack.c.l.b16 %v1833
        %v1849 = vpack.c.b16 %v1848, %v1847
        %v1852 = vsel %vm1625, %v1844, 0
        %1854 = vmatpush.bf16.msra.mxu0 0
        %1855 = vmatpush.bf16.msra.mxu0 0
        %1856 = vmatpush.bf16.msra.mxu0 0
        %1857 = vmatpush.bf16.msra.mxu0 0
        %1858 = vmatpush.bf16.msra.mxu0 0
        %1859 = vmatpush.bf16.msra.mxu0 0
        %1860 = vmatpush.bf16.msra.mxu0 0
        %1861 = vmatpush.bf16.msra.mxu0 %v1849
        %1862 = vmatmul.bf16.gmra.mxu0 %v1852
        %v1863 = vpop.f32.mrf.mxu0
        %v1864 = vadd.f32 0.0, %v1863
        %v1865 = vpop.f32.mrf.mxu0
        %v1866 = vadd.f32 0.0, %v1865
        %1867 = vdwg.mxu0
        %v1870 = vunpack.c.l.b16 %v1826
        %v1871 = vunpack.c.l.b16 %v1827
        %v1872 = vpack.c.b16 %v1871, %v1870
        %v1875 = vunpack.c.l.b16 %v1834
        %v1876 = vunpack.c.l.b16 %v1835
        %v1877 = vpack.c.b16 %v1876, %v1875
        %v1880 = vsel %vm1625, %v1872, 0
        %1882 = vmatpush.bf16.msra.mxu0 0
        %1883 = vmatpush.bf16.msra.mxu0 0
        %1884 = vmatpush.bf16.msra.mxu0 0
        %1885 = vmatpush.bf16.msra.mxu0 0
        %1886 = vmatpush.bf16.msra.mxu0 0
        %1887 = vmatpush.bf16.msra.mxu0 0
        %1888 = vmatpush.bf16.msra.mxu0 0
        %1889 = vmatpush.bf16.msra.mxu0 %v1877
        %1890 = vmatmul.bf16.gmra.mxu0 %v1880
        %v1891 = vpop.f32.mrf.mxu0
        %v1892 = vadd.f32 0.0, %v1891
        %v1893 = vpop.f32.mrf.mxu0
        %v1894 = vadd.f32 0.0, %v1893
        %1895 = vdwg.mxu0
        %v1898 = vunpack.c.l.b16 %v1828
        %v1899 = vunpack.c.l.b16 %v1829
        %v1900 = vpack.c.b16 %v1899, %v1898
        %v1903 = vunpack.c.l.b16 %v1836
        %v1904 = vunpack.c.l.b16 %v1837
        %v1905 = vpack.c.b16 %v1904, %v1903
        %v1908 = vsel %vm1625, %v1900, 0
        %1910 = vmatpush.bf16.msra.mxu0 0
        %1911 = vmatpush.bf16.msra.mxu0 0
        %1912 = vmatpush.bf16.msra.mxu0 0
        %1913 = vmatpush.bf16.msra.mxu0 0
        %1914 = vmatpush.bf16.msra.mxu0 0
        %1915 = vmatpush.bf16.msra.mxu0 0
        %1916 = vmatpush.bf16.msra.mxu0 0
        %1917 = vmatpush.bf16.msra.mxu0 %v1905
        %1918 = vmatmul.bf16.gmra.mxu0 %v1908
        %v1919 = vpop.f32.mrf.mxu0
        %v1920 = vadd.f32 0.0, %v1919
        %v1921 = vpop.f32.mrf.mxu0
        %v1922 = vadd.f32 0.0, %v1921
        %1923 = vdwg.mxu0
        %v1926 = vunpack.c.l.b16 %v1830
        %v1927 = vunpack.c.l.b16 %v1831
        %v1928 = vpack.c.b16 %v1927, %v1926
        %v1931 = vunpack.c.l.b16 %v1838
        %v1932 = vunpack.c.l.b16 %v1839
        %v1933 = vpack.c.b16 %v1932, %v1931
        %v1936 = vsel %vm1625, %v1928, 0
        %1938 = vmatpush.bf16.msra.mxu0 0
        %1939 = vmatpush.bf16.msra.mxu0 0
        %1940 = vmatpush.bf16.msra.mxu0 0
        %1941 = vmatpush.bf16.msra.mxu0 0
        %1942 = vmatpush.bf16.msra.mxu0 0
        %1943 = vmatpush.bf16.msra.mxu0 0
        %1944 = vmatpush.bf16.msra.mxu0 0
        %1945 = vmatpush.bf16.msra.mxu0 %v1933
        %1946 = vmatmul.bf16.gmra.mxu0 %v1936
        %v1947 = vpop.f32.mrf.mxu0
        %v1948 = vadd.f32 0.0, %v1947
        %v1949 = vpop.f32.mrf.mxu0
        %v1950 = vadd.f32 0.0, %v1949
        %1951 = vdwg.mxu0
        %v1952 = vrot.slane %v1920, 4
        %v1953 = vsel %vm886, %v1952, %v1864
        %v1954 = vrot.slane %v1864, 4
        %v1955 = vsel %vm886, %v1920, %v1954
        %v1957 = vunpack.c.l.s4 1983009808
        %v1958 = vunpack.c.0.s8 %v1957
        %v1959 = vperm.slane %v1953, %v1958
        %v1961 = vunpack.c.l.s4 1983009808
        %v1962 = vunpack.c.0.s8 %v1961
        %v1963 = vperm.slane %v1955, %v1962
        %v1964 = vrot.slane %v1948, 4
        %v1965 = vsel %vm886, %v1964, %v1892
        %v1966 = vrot.slane %v1892, 4
        %v1967 = vsel %vm886, %v1948, %v1966
        %v1969 = vunpack.c.l.s4 1983009808
        %v1970 = vunpack.c.0.s8 %v1969
        %v1971 = vperm.slane %v1965, %v1970
        %v1973 = vunpack.c.l.s4 1983009808
        %v1974 = vunpack.c.0.s8 %v1973
        %v1975 = vperm.slane %v1967, %v1974
        %v1976 = vrot.slane %v1971, 4
        %v1977 = vsel %vm886, %v1976, %v1959
        %v1978 = vrot.slane %v1959, 4
        %v1979 = vsel %vm886, %v1971, %v1978
        %v1981 = vunpack.c.l.s4 1934713408
        %v1982 = vunpack.c.0.s8 %v1981
        %v1983 = vperm.slane %v1977, %v1982
        %v1985 = vunpack.c.l.s4 1934713408
        %v1986 = vunpack.c.0.s8 %v1985
        %v1987 = vperm.slane %v1979, %v1986
        %v1988 = vrot.slane %v1975, 4
        %v1989 = vsel %vm886, %v1988, %v1963
        %v1990 = vrot.slane %v1963, 4
        %v1991 = vsel %vm886, %v1975, %v1990
        %v1993 = vunpack.c.l.s4 1934713408
        %v1994 = vunpack.c.0.s8 %v1993
        %v1995 = vperm.slane %v1989, %v1994
        %v1997 = vunpack.c.l.s4 1934713408
        %v1998 = vunpack.c.0.s8 %v1997
        %v1999 = vperm.slane %v1991, %v1998
        %v2000 = vrot.slane %v1983, 4
        %v2001 = vsel %vm886, 0.0, %v2000
        %v2002 = vrot.slane %v1987, 4
        %v2003 = vsel %vm886, 0.0, %v2002
        %v2004 = vrot.slane %v1995, 4
        %v2005 = vsel %vm886, 0.0, %v2004
        %v2006 = vrot.slane %v1999, 4
        %v2007 = vsel %vm886, 0.0, %v2006
        %v2008 = vrot.slane %v1922, 4
        %v2009 = vsel %vm886, %v2008, %v1866
        %v2010 = vrot.slane %v1866, 4
        %v2011 = vsel %vm886, %v1922, %v2010
        %v2013 = vunpack.c.l.s4 1983009808
        %v2014 = vunpack.c.0.s8 %v2013
        %v2015 = vperm.slane %v2009, %v2014
        %v2017 = vunpack.c.l.s4 1983009808
        %v2018 = vunpack.c.0.s8 %v2017
        %v2019 = vperm.slane %v2011, %v2018
        %v2020 = vrot.slane %v1950, 4
        %v2021 = vsel %vm886, %v2020, %v1894
        %v2022 = vrot.slane %v1894, 4
        %v2023 = vsel %vm886, %v1950, %v2022
        %v2025 = vunpack.c.l.s4 1983009808
        %v2026 = vunpack.c.0.s8 %v2025
        %v2027 = vperm.slane %v2021, %v2026
        %v2029 = vunpack.c.l.s4 1983009808
        %v2030 = vunpack.c.0.s8 %v2029
        %v2031 = vperm.slane %v2023, %v2030
        %v2032 = vrot.slane %v2027, 4
        %v2033 = vsel %vm886, %v2032, %v2015
        %v2034 = vrot.slane %v2015, 4
        %v2035 = vsel %vm886, %v2027, %v2034
        %v2037 = vunpack.c.l.s4 1934713408
        %v2038 = vunpack.c.0.s8 %v2037
        %v2039 = vperm.slane %v2033, %v2038
        %v2041 = vunpack.c.l.s4 1934713408
        %v2042 = vunpack.c.0.s8 %v2041
        %v2043 = vperm.slane %v2035, %v2042
        %v2044 = vrot.slane %v2031, 4
        %v2045 = vsel %vm886, %v2044, %v2019
        %v2046 = vrot.slane %v2019, 4
        %v2047 = vsel %vm886, %v2031, %v2046
        %v2049 = vunpack.c.l.s4 1934713408
        %v2050 = vunpack.c.0.s8 %v2049
        %v2051 = vperm.slane %v2045, %v2050
        %v2053 = vunpack.c.l.s4 1934713408
        %v2054 = vunpack.c.0.s8 %v2053
        %v2055 = vperm.slane %v2047, %v2054
        %v2056 = vrot.slane %v2039, 4
        %v2057 = vsel %vm886, 0.0, %v2056
        %v2058 = vrot.slane %v2043, 4
        %v2059 = vsel %vm886, 0.0, %v2058
        %v2060 = vrot.slane %v2051, 4
        %v2061 = vsel %vm886, 0.0, %v2060
        %v2062 = vrot.slane %v2055, 4
        %v2063 = vsel %vm886, 0.0, %v2062
        %v2064 = vsel %vm886, %v2002, %v1983
        %v2066 = vunpack.c.l.s4 1983009808
        %v2067 = vunpack.c.0.s8 %v2066
        %v2068 = vperm.slane %v2064, %v2067
        %v2069 = vrot.slane %v2003, 4
        %v2070 = vsel %vm886, %v2069, %v2001
        %v2072 = vunpack.c.l.s4 1983009808
        %v2073 = vunpack.c.0.s8 %v2072
        %v2074 = vperm.slane %v2070, %v2073
        %v2075 = vsel %vm886, %v2006, %v1995
        %v2077 = vunpack.c.l.s4 1983009808
        %v2078 = vunpack.c.0.s8 %v2077
        %v2079 = vperm.slane %v2075, %v2078
        %v2080 = vrot.slane %v2007, 4
        %v2081 = vsel %vm886, %v2080, %v2005
        %v2083 = vunpack.c.l.s4 1983009808
        %v2084 = vunpack.c.0.s8 %v2083
        %v2085 = vperm.slane %v2081, %v2084
        %v2086 = vrot.slane %v2074, 4
        %v2087 = vsel %vm886, %v2086, %v2068
        %v2088 = vrot.slane %v2068, 4
        %v2089 = vsel %vm886, %v2074, %v2088
        %v2091 = vunpack.c.l.s4 1934713408
        %v2092 = vunpack.c.0.s8 %v2091
        %v2093 = vperm.slane %v2087, %v2092
        %v2095 = vunpack.c.l.s4 1934713408
        %v2096 = vunpack.c.0.s8 %v2095
        %v2097 = vperm.slane %v2089, %v2096
        %v2098 = vrot.slane %v2085, 4
        %v2099 = vsel %vm886, %v2098, %v2079
        %v2100 = vrot.slane %v2079, 4
        %v2101 = vsel %vm886, %v2085, %v2100
        %v2103 = vunpack.c.l.s4 1934713408
        %v2104 = vunpack.c.0.s8 %v2103
        %v2105 = vperm.slane %v2099, %v2104
        %v2107 = vunpack.c.l.s4 1934713408
        %v2108 = vunpack.c.0.s8 %v2107
        %v2109 = vperm.slane %v2101, %v2108
        %v2110 = vrot.slane %v2105, 4
        %v2111 = vsel %vm886, %v2110, %v2093
        %v2112 = vrot.slane %v2093, 4
        %v2113 = vsel %vm886, %v2105, %v2112
        %v2114 = vrot.slane %v2109, 4
        %v2115 = vsel %vm886, %v2114, %v2097
        %v2116 = vrot.slane %v2097, 4
        %v2117 = vsel %vm886, %v2109, %v2116
        %v2118 = vsel %vm886, %v2058, %v2039
        %v2120 = vunpack.c.l.s4 1983009808
        %v2121 = vunpack.c.0.s8 %v2120
        %v2122 = vperm.slane %v2118, %v2121
        %v2123 = vrot.slane %v2059, 4
        %v2124 = vsel %vm886, %v2123, %v2057
        %v2126 = vunpack.c.l.s4 1983009808
        %v2127 = vunpack.c.0.s8 %v2126
        %v2128 = vperm.slane %v2124, %v2127
        %v2129 = vsel %vm886, %v2062, %v2051
        %v2131 = vunpack.c.l.s4 1983009808
        %v2132 = vunpack.c.0.s8 %v2131
        %v2133 = vperm.slane %v2129, %v2132
        %v2134 = vrot.slane %v2063, 4
        %v2135 = vsel %vm886, %v2134, %v2061
        %v2137 = vunpack.c.l.s4 1983009808
        %v2138 = vunpack.c.0.s8 %v2137
        %v2139 = vperm.slane %v2135, %v2138
        %v2140 = vrot.slane %v2128, 4
        %v2141 = vsel %vm886, %v2140, %v2122
        %v2142 = vrot.slane %v2122, 4
        %v2143 = vsel %vm886, %v2128, %v2142
        %v2145 = vunpack.c.l.s4 1934713408
        %v2146 = vunpack.c.0.s8 %v2145
        %v2147 = vperm.slane %v2141, %v2146
        %v2149 = vunpack.c.l.s4 1934713408
        %v2150 = vunpack.c.0.s8 %v2149
        %v2151 = vperm.slane %v2143, %v2150
        %v2152 = vrot.slane %v2139, 4
        %v2153 = vsel %vm886, %v2152, %v2133
        %v2154 = vrot.slane %v2133, 4
        %v2155 = vsel %vm886, %v2139, %v2154
        %v2157 = vunpack.c.l.s4 1934713408
        %v2158 = vunpack.c.0.s8 %v2157
        %v2159 = vperm.slane %v2153, %v2158
        %v2161 = vunpack.c.l.s4 1934713408
        %v2162 = vunpack.c.0.s8 %v2161
        %v2163 = vperm.slane %v2155, %v2162
        %v2164 = vrot.slane %v2159, 4
        %v2165 = vsel %vm886, %v2164, %v2147
        %v2166 = vrot.slane %v2147, 4
        %v2167 = vsel %vm886, %v2159, %v2166
        %v2168 = vrot.slane %v2163, 4
        %v2169 = vsel %vm886, %v2168, %v2151
        %v2170 = vrot.slane %v2151, 4
        %v2171 = vsel %vm886, %v2163, %v2170
        %2174 = vrot.lane.b32.xlu0 %v2113, 16
        %v2175 = vpop.permute.xlu0 %2174
        %2176 = vrot.lane.b32.xlu0 %v2167, 16
        %v2177 = vpop.permute.xlu0 %2176
        %2182 = vrot.lane.b32.xlu0 %v2115, 32
        %v2183 = vpop.permute.xlu0 %2182
        %2184 = vrot.lane.b32.xlu0 %v2169, 32
        %v2185 = vpop.permute.xlu0 %2184
        %2190 = vrot.lane.b32.xlu0 %v2117, 48
        %v2191 = vpop.permute.xlu0 %2190
        %2192 = vrot.lane.b32.xlu0 %v2171, 48
        %v2193 = vpop.permute.xlu0 %2192
        %v2196 = vsel %vm1625, %v2111, %v2175
        %v2197 = vsel %vm1625, %v2165, %v2177
        %vm2198 = vcmask 261120
        %v2199 = vsel %vm2198, %v2196, %v2183
        %v2200 = vsel %vm2198, %v2197, %v2185
        %vm2201 = vcmask 392192
        %v2202 = vsel %vm2201, %v2199, %v2191
        %v2203 = vsel %vm2201, %v2200, %v2193
        %v2204 = vpack.c.bf16 %v2203, %v2202
        %v2205 = vld [vmem:[%s676] sm:$0xf]
        %v2206 = vld [vmem:[%s676 + $0x4] sm:$0xf]
        %v2207 = vld [vmem:[%s676 + $0x8] sm:$0xf]
        %v2208 = vld [vmem:[%s676 + $0xc] sm:$0xf]
        %v2209 = vld [vmem:[%s676 + $0x10] sm:$0xf]
        %v2210 = vld [vmem:[%s676 + $0x14] sm:$0xf]
        %v2211 = vld [vmem:[%s676 + $0x18] sm:$0xf]
        %v2212 = vld [vmem:[%s676 + $0x1c] sm:$0xf]
        %v2213 = vld [vmem:[%s679] sm:$0x1]
        %v2215 = vperm.slane %v2213, 0
        %v2225 = vunpack.c.l.b16 %v2205
        %v2226 = vunpack.c.l.b16 %v2206
        %v2227 = vunpack.c.l.b16 %v2207
        %v2228 = vunpack.c.l.b16 %v2208
        %v2229 = vunpack.c.l.b16 %v2209
        %v2230 = vunpack.c.l.b16 %v2210
        %v2231 = vunpack.c.l.b16 %v2211
        %v2232 = vunpack.c.l.b16 %v2212
        %v2233 = vpack.c.b16 %v2226, %v2225
        %v2234 = vpack.c.b16 %v2228, %v2227
        %v2235 = vpack.c.b16 %v2230, %v2229
        %v2236 = vpack.c.b16 %v2232, %v2231
        %v2242 = vsel %vm717, %v2204, 0
        %2244 = vmatpush.bf16.msra.mxu0 0
        %2245 = vmatpush.bf16.msra.mxu0 0
        %2246 = vmatpush.bf16.msra.mxu0 0
        %2247 = vmatpush.bf16.msra.mxu0 0
        %2248 = vmatpush.bf16.msra.mxu0 %v2236
        %2249 = vmatpush.bf16.msra.mxu0 %v2235
        %2250 = vmatpush.bf16.msra.mxu0 %v2234
        %2251 = vmatpush.bf16.msra.mxu0 %v2233
        %2252 = vmatmul.bf16.gmra.mxu0 %v2242
        %v2253 = vpop.f32.mrf.mxu0
        %v2254 = vadd.f32 %v2215, %v2253
        %v2255 = vpop.f32.mrf.mxu0
        %v2256 = vadd.f32 %v2215, %v2255
        %2257 = vdwg.mxu0
        %v2258 = vadd.f32 %v2254, %v713
        %v2259 = vadd.f32 %v2256, %v714
        %v2260 = vld [vmem:[%s682] sm:$0x1]
        %v2261 = vld [vmem:[%s685] sm:$0x1]
        %v2262 = vsel %vm717, %v2258, 0.0
        %2263 = vadd.xlane.f32.xlu0 %v2262
        %v2264 = vpop.xlane.xlu0 %2263
        %v2265 = vsel %vm717, %v2259, 0.0
        %2266 = vadd.xlane.f32.xlu0 %v2265
        %v2267 = vpop.xlane.xlu0 %2266
        %v2268 = vmul.f32 %v2264, %v730
        %v2269 = vmul.f32 %v2267, %v730
        %v2270 = vsub.f32 %v2258, %v2268
        %v2271 = vsub.f32 %v2259, %v2269
        %v2272 = vmul.f32 %v2270, %v2270
        %v2273 = vmul.f32 %v2271, %v2271
        %v2274 = vsel %vm717, %v2272, 0.0
        %2275 = vadd.xlane.f32.xlu0 %v2274
        %v2276 = vpop.xlane.xlu0 %2275
        %v2277 = vsel %vm717, %v2273, 0.0
        %2278 = vadd.xlane.f32.xlu0 %v2277
        %v2279 = vpop.xlane.xlu0 %2278
        %v2280 = vmul.f32 %v2276, %v730
        %v2281 = vmul.f32 %v2279, %v730
        %v2282 = vadd.f32 %v2280, 1e-05
        %v2283 = vadd.f32 %v2281, 1e-05
        %v2284 = vrsqrt.pop %v2282
        %v2285 = vmul.f32 %v2284, %v2282
        %v2286 = vmul.f32 %v2285, %v2284
        %v2287 = vmul.f32 0.5, %v2286
        %v2288 = vsub.f32 1.5, %v2287
        %v2289 = vmul.f32 %v2284, %v2288
        %vm2290 = vweird.f32 %v2282
        %vm2291 = vweird.f32 %v2284
        %vm2292 = vmor %vm2290, %vm2291
        %v2293 = vsel %vm2292, %v2284, %v2289
        %v2294 = vrsqrt.pop %v2283
        %v2295 = vmul.f32 %v2294, %v2283
        %v2296 = vmul.f32 %v2295, %v2294
        %v2297 = vmul.f32 0.5, %v2296
        %v2298 = vsub.f32 1.5, %v2297
        %v2299 = vmul.f32 %v2294, %v2298
        %vm2300 = vweird.f32 %v2283
        %vm2301 = vweird.f32 %v2294
        %vm2302 = vmor %vm2300, %vm2301
        %v2303 = vsel %vm2302, %v2294, %v2299
        %v2304 = vmul.f32 %v2270, %v2293
        %v2305 = vmul.f32 %v2271, %v2303
        %v2307 = vperm.slane %v2260, 0
        %v2309 = vmul.f32 %v2304, %v2307
        %v2310 = vmul.f32 %v2305, %v2307
        %v2312 = vperm.slane %v2261, 0
        %v2314 = vadd.f32 %v2309, %v2312
        %v2315 = vadd.f32 %v2310, %v2312
        %v2316 = vpack.c.bf16 %v2315, %v2314
        %v2317 = vld [vmem:[%s690] sm:$0xff]
        %v2318 = vld [vmem:[%s690 + $0x8] sm:$0xff]
        %v2319 = vld [vmem:[%s690 + $0x10] sm:$0xff]
        %v2320 = vld [vmem:[%s690 + $0x18] sm:$0xff]
        %v2321 = vld [vmem:[%s690 + $0x20] sm:$0xff]
        %v2322 = vld [vmem:[%s690 + $0x28] sm:$0xff]
        %v2323 = vld [vmem:[%s690 + $0x30] sm:$0xff]
        %v2324 = vld [vmem:[%s690 + $0x38] sm:$0xff]
        %v2325 = vld [vmem:[%s694] sm:$0x3]
        %v2327 = vperm.slane %v2325, 0
        %v2328 = vperm.slane %v2325, 1
        %v2339 = vunpack.c.l.b16 %v2317
        %v2340 = vunpack.c.h.b16 %v2317
        %v2341 = vunpack.c.l.b16 %v2318
        %v2342 = vunpack.c.h.b16 %v2318
        %v2343 = vunpack.c.l.b16 %v2319
        %v2344 = vunpack.c.h.b16 %v2319
        %v2345 = vunpack.c.l.b16 %v2320
        %v2346 = vunpack.c.h.b16 %v2320
        %v2347 = vunpack.c.l.b16 %v2321
        %v2348 = vunpack.c.h.b16 %v2321
        %v2349 = vunpack.c.l.b16 %v2322
        %v2350 = vunpack.c.h.b16 %v2322
        %v2351 = vunpack.c.l.b16 %v2323
        %v2352 = vunpack.c.h.b16 %v2323
        %v2353 = vunpack.c.l.b16 %v2324
        %v2354 = vunpack.c.h.b16 %v2324
        %v2355 = vpack.c.b16 %v2341, %v2339
        %v2356 = vpack.c.b16 %v2342, %v2340
        %v2357 = vpack.c.b16 %v2345, %v2343
        %v2358 = vpack.c.b16 %v2346, %v2344
        %v2359 = vpack.c.b16 %v2349, %v2347
        %v2360 = vpack.c.b16 %v2350, %v2348
        %v2361 = vpack.c.b16 %v2353, %v2351
        %v2362 = vpack.c.b16 %v2354, %v2352
        %v2372 = vsel %vm717, %v2316, 0
        %2374 = vmatpush.bf16.msra.mxu0 0
        %2375 = vmatpush.bf16.msra.mxu0 0
        %2376 = vmatpush.bf16.msra.mxu0 0
        %2377 = vmatpush.bf16.msra.mxu0 0
        %2378 = vmatpush.bf16.msra.mxu0 %v2361
        %2379 = vmatpush.bf16.msra.mxu0 %v2359
        %2380 = vmatpush.bf16.msra.mxu0 %v2357
        %2381 = vmatpush.bf16.msra.mxu0 %v2355
        %2382 = vmatmul.bf16.gmra.mxu0 %v2372
        %v2383 = vpop.f32.mrf.mxu0
        %v2384 = vadd.f32 %v2327, %v2383
        %v2385 = vpop.f32.mrf.mxu0
        %v2386 = vadd.f32 %v2327, %v2385
        %2387 = vdwg.mxu0
        %2388 = vmatpush.bf16.msra.mxu0 0
        %2389 = vmatpush.bf16.msra.mxu0 0
        %2390 = vmatpush.bf16.msra.mxu0 0
        %2391 = vmatpush.bf16.msra.mxu0 0
        %2392 = vmatpush.bf16.msra.mxu0 %v2362
        %2393 = vmatpush.bf16.msra.mxu0 %v2360
        %2394 = vmatpush.bf16.msra.mxu0 %v2358
        %2395 = vmatpush.bf16.msra.mxu0 %v2356
        %2396 = vmatmul.bf16.gmra.mxu0 %v2372
        %v2397 = vpop.f32.mrf.mxu0
        %v2398 = vadd.f32 %v2328, %v2397
        %v2399 = vpop.f32.mrf.mxu0
        %v2400 = vadd.f32 %v2328, %v2399
        %2401 = vdwg.mxu0
        %v2402 = vmul.f32 %v2384, 1.702
        %v2403 = vmul.f32 %v2398, 1.702
        %v2404 = vmul.f32 %v2386, 1.702
        %v2405 = vmul.f32 %v2400, 1.702
        %v2406 = vxor.u32 %v2402, 2147483648
        %v2407 = vxor.u32 %v2403, 2147483648
        %v2408 = vxor.u32 %v2404, 2147483648
        %v2409 = vxor.u32 %v2405, 2147483648
        %v2410 = vmul.f32 %v2406, 1.442695
        %v2411 = vpow.pop %v2410
        %v2412 = vmul.f32 %v2407, 1.442695
        %v2413 = vpow.pop %v2412
        %v2414 = vmul.f32 %v2408, 1.442695
        %v2415 = vpow.pop %v2414
        %v2416 = vmul.f32 %v2409, 1.442695
        %v2417 = vpow.pop %v2416
        %v2418 = vadd.f32 %v2411, 1.0
        %v2419 = vadd.f32 %v2413, 1.0
        %v2420 = vadd.f32 %v2415, 1.0
        %v2421 = vadd.f32 %v2417, 1.0
        %v2422 = vrcp.pop %v2418
        %v2423 = vmul.f32 %v2418, %v2422
        %v2424 = vsub.f32 1.0, %v2423
        %v2425 = vmul.f32 %v2422, %v2424
        %v2426 = vadd.f32 %v2422, %v2425
        %vm2427 = vweird.f32 %v2418
        %vm2428 = vweird.f32 %v2422
        %vm2429 = vmor %vm2427, %vm2428
        %v2430 = vsel %vm2429, %v2422, %v2426
        %v2431 = vand.u32 2147483647, %v2418
        %vm2432 = vcmp.eq.f32.partialorder %v2431, 8.507059e+37
        %v2433 = vand.u32 %v2418, 2147483648
        %v2434 = vor.u32 1.1754944e-38, %v2433
        %v2435 = vsel %vm2432, %v2434, %v2430
        %v2436 = vmul.f32 1.0, %v2435
        %v2437 = vrcp.pop %v2419
        %v2438 = vmul.f32 %v2419, %v2437
        %v2439 = vsub.f32 1.0, %v2438
        %v2440 = vmul.f32 %v2437, %v2439
        %v2441 = vadd.f32 %v2437, %v2440
        %vm2442 = vweird.f32 %v2419
        %vm2443 = vweird.f32 %v2437
        %vm2444 = vmor %vm2442, %vm2443
        %v2445 = vsel %vm2444, %v2437, %v2441
        %v2446 = vand.u32 2147483647, %v2419
        %vm2447 = vcmp.eq.f32.partialorder %v2446, 8.507059e+37
        %v2448 = vand.u32 %v2419, 2147483648
        %v2449 = vor.u32 1.1754944e-38, %v2448
        %v2450 = vsel %vm2447, %v2449, %v2445
        %v2451 = vmul.f32 1.0, %v2450
        %v2452 = vrcp.pop %v2420
        %v2453 = vmul.f32 %v2420, %v2452
        %v2454 = vsub.f32 1.0, %v2453
        %v2455 = vmul.f32 %v2452, %v2454
        %v2456 = vadd.f32 %v2452, %v2455
        %vm2457 = vweird.f32 %v2420
        %vm2458 = vweird.f32 %v2452
        %vm2459 = vmor %vm2457, %vm2458
        %v2460 = vsel %vm2459, %v2452, %v2456
        %v2461 = vand.u32 2147483647, %v2420
        %vm2462 = vcmp.eq.f32.partialorder %v2461, 8.507059e+37
        %v2463 = vand.u32 %v2420, 2147483648
        %v2464 = vor.u32 1.1754944e-38, %v2463
        %v2465 = vsel %vm2462, %v2464, %v2460
        %v2466 = vmul.f32 1.0, %v2465
        %v2467 = vrcp.pop %v2421
        %v2468 = vmul.f32 %v2421, %v2467
        %v2469 = vsub.f32 1.0, %v2468
        %v2470 = vmul.f32 %v2467, %v2469
        %v2471 = vadd.f32 %v2467, %v2470
        %vm2472 = vweird.f32 %v2421
        %vm2473 = vweird.f32 %v2467
        %vm2474 = vmor %vm2472, %vm2473
        %v2475 = vsel %vm2474, %v2467, %v2471
        %v2476 = vand.u32 2147483647, %v2421
        %vm2477 = vcmp.eq.f32.partialorder %v2476, 8.507059e+37
        %v2478 = vand.u32 %v2421, 2147483648
        %v2479 = vor.u32 1.1754944e-38, %v2478
        %v2480 = vsel %vm2477, %v2479, %v2475
        %v2481 = vmul.f32 1.0, %v2480
        %v2482 = vmul.f32 %v2384, %v2436
        %v2483 = vmul.f32 %v2398, %v2451
        %v2484 = vmul.f32 %v2386, %v2466
        %v2485 = vmul.f32 %v2400, %v2481
        %v2486 = vpack.c.bf16 %v2484, %v2482
        %v2487 = vpack.c.bf16 %v2485, %v2483
        %v2488 = vld [vmem:[%s699] sm:$0xf]
        %v2489 = vld [vmem:[%s699 + $0x4] sm:$0xf]
        %v2490 = vld [vmem:[%s699 + $0x8] sm:$0xf]
        %v2491 = vld [vmem:[%s699 + $0xc] sm:$0xf]
        %v2492 = vld [vmem:[%s699 + $0x10] sm:$0xf]
        %v2493 = vld [vmem:[%s699 + $0x14] sm:$0xf]
        %v2494 = vld [vmem:[%s699 + $0x18] sm:$0xf]
        %v2495 = vld [vmem:[%s699 + $0x1c] sm:$0xf]
        %v2496 = vld [vmem:[%s699 + $0x20] sm:$0xf]
        %v2497 = vld [vmem:[%s699 + $0x24] sm:$0xf]
        %v2498 = vld [vmem:[%s699 + $0x28] sm:$0xf]
        %v2499 = vld [vmem:[%s699 + $0x2c] sm:$0xf]
        %v2500 = vld [vmem:[%s699 + $0x30] sm:$0xf]
        %v2501 = vld [vmem:[%s699 + $0x34] sm:$0xf]
        %v2502 = vld [vmem:[%s699 + $0x38] sm:$0xf]
        %v2503 = vld [vmem:[%s699 + $0x3c] sm:$0xf]
        %v2504 = vld [vmem:[%s699 + $0x40] sm:$0xf]
        %v2505 = vld [vmem:[%s699 + $0x44] sm:$0xf]
        %v2506 = vld [vmem:[%s699 + $0x48] sm:$0xf]
        %v2507 = vld [vmem:[%s699 + $0x4c] sm:$0xf]
        %v2508 = vld [vmem:[%s699 + $0x50] sm:$0xf]
        %v2509 = vld [vmem:[%s699 + $0x54] sm:$0xf]
        %v2510 = vld [vmem:[%s699 + $0x58] sm:$0xf]
        %v2511 = vld [vmem:[%s699 + $0x5c] sm:$0xf]
        %v2512 = vld [vmem:[%s699 + $0x60] sm:$0xf]
        %v2513 = vld [vmem:[%s699 + $0x64] sm:$0xf]
        %v2514 = vld [vmem:[%s699 + $0x68] sm:$0xf]
        %v2515 = vld [vmem:[%s699 + $0x6c] sm:$0xf]
        %v2516 = vld [vmem:[%s699 + $0x70] sm:$0xf]
        %v2517 = vld [vmem:[%s699 + $0x74] sm:$0xf]
        %v2518 = vld [vmem:[%s699 + $0x78] sm:$0xf]
        %v2519 = vld [vmem:[%s699 + $0x7c] sm:$0xf]
        %v2520 = vld [vmem:[%s702] sm:$0x1]
        %v2522 = vperm.slane %v2520, 0
        %v2556 = vunpack.c.l.b16 %v2488
        %v2557 = vunpack.c.l.b16 %v2489
        %v2558 = vunpack.c.l.b16 %v2490
        %v2559 = vunpack.c.l.b16 %v2491
        %v2560 = vunpack.c.l.b16 %v2492
        %v2561 = vunpack.c.l.b16 %v2493
        %v2562 = vunpack.c.l.b16 %v2494
        %v2563 = vunpack.c.l.b16 %v2495
        %v2564 = vunpack.c.l.b16 %v2496
        %v2565 = vunpack.c.l.b16 %v2497
        %v2566 = vunpack.c.l.b16 %v2498
        %v2567 = vunpack.c.l.b16 %v2499
        %v2568 = vunpack.c.l.b16 %v2500
        %v2569 = vunpack.c.l.b16 %v2501
        %v2570 = vunpack.c.l.b16 %v2502
        %v2571 = vunpack.c.l.b16 %v2503
        %v2572 = vunpack.c.l.b16 %v2504
        %v2573 = vunpack.c.l.b16 %v2505
        %v2574 = vunpack.c.l.b16 %v2506
        %v2575 = vunpack.c.l.b16 %v2507
        %v2576 = vunpack.c.l.b16 %v2508
        %v2577 = vunpack.c.l.b16 %v2509
        %v2578 = vunpack.c.l.b16 %v2510
        %v2579 = vunpack.c.l.b16 %v2511
        %v2580 = vunpack.c.l.b16 %v2512
        %v2581 = vunpack.c.l.b16 %v2513
        %v2582 = vunpack.c.l.b16 %v2514
        %v2583 = vunpack.c.l.b16 %v2515
        %v2584 = vunpack.c.l.b16 %v2516
        %v2585 = vunpack.c.l.b16 %v2517
        %v2586 = vunpack.c.l.b16 %v2518
        %v2587 = vunpack.c.l.b16 %v2519
        %v2588 = vpack.c.b16 %v2557, %v2556
        %v2589 = vpack.c.b16 %v2559, %v2558
        %v2590 = vpack.c.b16 %v2561, %v2560
        %v2591 = vpack.c.b16 %v2563, %v2562
        %v2592 = vpack.c.b16 %v2565, %v2564
        %v2593 = vpack.c.b16 %v2567, %v2566
        %v2594 = vpack.c.b16 %v2569, %v2568
        %v2595 = vpack.c.b16 %v2571, %v2570
        %v2596 = vpack.c.b16 %v2573, %v2572
        %v2597 = vpack.c.b16 %v2575, %v2574
        %v2598 = vpack.c.b16 %v2577, %v2576
        %v2599 = vpack.c.b16 %v2579, %v2578
        %v2600 = vpack.c.b16 %v2581, %v2580
        %v2601 = vpack.c.b16 %v2583, %v2582
        %v2602 = vpack.c.b16 %v2585, %v2584
        %v2603 = vpack.c.b16 %v2587, %v2586
        %2620 = vmatpush.bf16.msra.mxu0 %v2595
        %2621 = vmatpush.bf16.msra.mxu0 %v2594
        %2622 = vmatpush.bf16.msra.mxu0 %v2593
        %2623 = vmatpush.bf16.msra.mxu0 %v2592
        %2624 = vmatpush.bf16.msra.mxu0 %v2591
        %2625 = vmatpush.bf16.msra.mxu0 %v2590
        %2626 = vmatpush.bf16.msra.mxu0 %v2589
        %2627 = vmatpush.bf16.msra.mxu0 %v2588
        %2628 = vmatmul.bf16.gmra.mxu0 %v2486
        %v2629 = vpop.f32.mrf.mxu0
        %v2630 = vadd.f32 %v2522, %v2629
        %v2631 = vpop.f32.mrf.mxu0
        %v2632 = vadd.f32 %v2522, %v2631
        %2633 = vdwg.mxu0
        %2634 = vmatpush.bf16.msra.mxu0 %v2603
        %2635 = vmatpush.bf16.msra.mxu0 %v2602
        %2636 = vmatpush.bf16.msra.mxu0 %v2601
        %2637 = vmatpush.bf16.msra.mxu0 %v2600
        %2638 = vmatpush.bf16.msra.mxu0 %v2599
        %2639 = vmatpush.bf16.msra.mxu0 %v2598
        %2640 = vmatpush.bf16.msra.mxu0 %v2597
        %2641 = vmatpush.bf16.msra.mxu0 %v2596
        %2642 = vmatmul.bf16.gmra.mxu0 %v2487
        %v2643 = vpop.f32.mrf.mxu0
        %v2644 = vadd.f32 %v2630, %v2643
        %v2645 = vpop.f32.mrf.mxu0
        %v2646 = vadd.f32 %v2632, %v2645
        %2647 = vdwg.mxu0
        %v2648 = vadd.f32 %v2644, %v2258
        %v2649 = vadd.f32 %v2646, %v2259
        %p2650 = scmp.eq.s32.totalorder %s34, 1
        // Predicated region
        $region85: #{tpu_custom_call.1} parent=79 // pred_check
          %p2651 = pneg %p2650
        $region86: #{tpu_custom_call.1} parent=79 // pred_check_branch
          %2653 = sbr.rel (%p2651) target = $region88
        $region87: #{tpu_custom_call.1} parent=79 // pred_region
          %v2654 = vld [vmem:[%s13] sm:$0x1]
          %v2655 = vld [vmem:[%s14] sm:$0x1]
          %v2656 = vsel %vm717, %v2648, 0.0
          %2657 = vadd.xlane.f32.xlu0 %v2656
          %v2658 = vpop.xlane.xlu0 %2657
          %v2659 = vsel %vm717, %v2649, 0.0
          %2660 = vadd.xlane.f32.xlu0 %v2659
          %v2661 = vpop.xlane.xlu0 %2660
          %v2662 = vmul.f32 %v2658, %v730
          %v2663 = vmul.f32 %v2661, %v730
          %v2664 = vsub.f32 %v2648, %v2662
          %v2665 = vsub.f32 %v2649, %v2663
          %v2666 = vmul.f32 %v2664, %v2664
          %v2667 = vmul.f32 %v2665, %v2665
          %v2668 = vsel %vm717, %v2666, 0.0
          %2669 = vadd.xlane.f32.xlu0 %v2668
          %v2670 = vpop.xlane.xlu0 %2669
          %v2671 = vsel %vm717, %v2667, 0.0
          %2672 = vadd.xlane.f32.xlu0 %v2671
          %v2673 = vpop.xlane.xlu0 %2672
          %v2674 = vmul.f32 %v2670, %v730
          %v2675 = vmul.f32 %v2673, %v730
          %v2676 = vadd.f32 %v2674, 1e-05
          %v2677 = vadd.f32 %v2675, 1e-05
          %v2678 = vrsqrt.pop %v2676
          %v2679 = vmul.f32 %v2678, %v2676
          %v2680 = vmul.f32 %v2679, %v2678
          %v2681 = vmul.f32 0.5, %v2680
          %v2682 = vsub.f32 1.5, %v2681
          %v2683 = vmul.f32 %v2678, %v2682
          %vm2684 = vweird.f32 %v2676
          %vm2685 = vweird.f32 %v2678
          %vm2686 = vmor %vm2684, %vm2685
          %v2687 = vsel %vm2686, %v2678, %v2683
          %v2688 = vrsqrt.pop %v2677
          %v2689 = vmul.f32 %v2688, %v2677
          %v2690 = vmul.f32 %v2689, %v2688
          %v2691 = vmul.f32 0.5, %v2690
          %v2692 = vsub.f32 1.5, %v2691
          %v2693 = vmul.f32 %v2688, %v2692
          %vm2694 = vweird.f32 %v2677
          %vm2695 = vweird.f32 %v2688
          %vm2696 = vmor %vm2694, %vm2695
          %v2697 = vsel %vm2696, %v2688, %v2693
          %v2698 = vmul.f32 %v2664, %v2687
          %v2699 = vmul.f32 %v2665, %v2697
          %v2701 = vperm.slane %v2654, 0
          %v2703 = vmul.f32 %v2698, %v2701
          %v2704 = vmul.f32 %v2699, %v2701
          %v2706 = vperm.slane %v2655, 0
          %v2708 = vadd.f32 %v2703, %v2706
          %v2709 = vadd.f32 %v2704, %v2706
          %2710 = vst.msk [vmem:[%s651] sm:$0xff] %vm717, %v2708
          %2711 = vst.msk [vmem:[%s651 + $0x8] sm:$0xff] %vm717, %v2709
        $region88: #{tpu_custom_call.1} parent=79 // pred_fallthru
          _
        %p2712 = scmp.lt.s32.totalorder %s34, 1
        // Predicated region
        $region89: #{tpu_custom_call.1} parent=79 // pred_check
          %p2713 = pneg %p2712
        $region90: #{tpu_custom_call.1} parent=79 // pred_check_branch
          %2715 = sbr.rel (%p2713) target = $region92
        $region91: #{tpu_custom_call.1} parent=79 // pred_region
          %2716 = vst.msk [vmem:[%s651] sm:$0xff] %vm717, %v2648
          %2717 = vst.msk [vmem:[%s651 + $0x8] sm:$0xff] %vm717, %v2649
        $region92: #{tpu_custom_call.1} parent=79 // pred_fallthru
          _
        %s2718 = sand.u32 %s429, 1
        %s2719 = scalar_lea.sflag [#allocation3], %s2718
        %s2720 = sand.u32 %s429, 1
        %s2721 = smul.addr %s2720, 16
        %s2722 = scalar_lea.vmem [#allocation2], %s2721
        // Predicated region
        $region93: #{tpu_custom_call.1} parent=79 // pred_check
          %p2723 = pneg %p439
        $region94: #{tpu_custom_call.1} parent=79 // pred_check_branch
          %2725 = sbr.rel (%p2723) target = $region96
        $region95: #{tpu_custom_call.1} parent=79 // pred_region
          %2727 = vsyncadd %s2719, 0
          %s2728 = smul.addr %s33, 2
          %s2729 = smul.addr %s2728, 8
          %s2730 = scalar_lea.hbm %s15, %s2729
          %s2731 = sshll.u32 %s2722, 4
          %s2732 = int_to_ptr.vmem [resolvable:$true] %s2731
          %s2733 = sshll.u32 %s2730, 4
          %s2734 = int_to_ptr.hbm [resolvable:$true] %s2733
          %2739 = dma.vmem_to_hbm [thread:$0]  %s2732, 256, %s2734, %s2719, 128, 128, 8
        $region96: #{tpu_custom_call.1} parent=79 // pred_fallthru
          _
      $region80: #{tpu_custom_call.1} parent=5 // pred_fallthru
        _
      %p2740 = scmp.le.s32.totalorder 2, %s24
      // Predicated region
      $region97: #{tpu_custom_call.1} parent=5 // pred_check
        %p2741 = pneg %p2740
      $region98: #{tpu_custom_call.1} parent=5 // pred_check_branch
        %2743 = sbr.rel (%p2741) target = $region100
      $region99: #{tpu_custom_call.1} parent=5 // pred_region
        %s2744 = ssub.s32 %s24, 2
        // Predicated region
        $region101: #{tpu_custom_call.1} parent=99 // pred_check
          %p2745 = pneg %p445
        $region102: #{tpu_custom_call.1} parent=99 // pred_check_branch
          %2747 = sbr.rel (%p2745) target = $region104
        $region103: #{tpu_custom_call.1} parent=99 // pred_region
          %s2748 = sand.u32 %s430, 1
          %s2749 = scalar_lea.sflag [#allocation3], %s2748
          %s2750 = sand.u32 %s430, 1
          %s2751 = smul.addr %s2750, 16
          %s2752 = scalar_lea.vmem [#allocation2], %s2751
          %2754 = dma.done %s2749, 256
        $region104: #{tpu_custom_call.1} parent=99 // pred_fallthru
          _
      $region100: #{tpu_custom_call.1} parent=5 // pred_fallthru
        _
    $region6: #{tpu_custom_call.1} parent=1 // loop_footer
      %s28 = sadd.s32 1, %s24
    $region7: #{tpu_custom_call.1} parent=1 // loop_footer_branch
      %23 = sbr.rel target = $region3
    $region8: #{tpu_custom_call.1} parent=1 // loop_exit
      _
    %2755 = vsyncpa [#allocation3], 1
    %s2756 = scalar_lea.sflag [#allocation3], 1
    %2757 = vsyncpa %s2756, 1

</llo_original>
